<compile_context>
chip_gen: v7x
topology: tpu7x:2x2x1
jax: 0.10.0
libtpu: 0.0.40
codegen_flags: <defaults>
</compile_context>

<pallas_src>
import jax
import jax.numpy as jnp
from jax.experimental import pallas as pl
from jax.experimental.pallas import tpu as pltpu


def se_kernel(x_ref, w1_ref, w2_ref, o_ref):
    # x_ref : (Bb, C, HW) input dtype
    # w1_ref: (Cr, C) f32   (PyTorch fc1 weight, (out, in) layout)
    # w2_ref: (C, Cr) f32   (PyTorch fc2 weight, (out, in) layout)
    # o_ref : (Bb, C, HW)

    # squeeze: global average pool over HW (lane-axis reduce, f32 accumulate).
    # The cast lives only inside this reduce; no f32 copy of the tile is kept
    # live across the excitation below.
    y = jnp.mean(x_ref[...].astype(jnp.float32), axis=-1)            # (Bb, C)

    # excitation: Linear -> ReLU -> Linear -> Sigmoid, all f32.
    # Shapes are far below the MXU tile (N = Cr ~ 4, M = Bb), so use VPU
    # broadcast-multiply + last-axis reduces instead of padded MXU round trips.
    h = jnp.sum(y[:, None, :] * w1_ref[...][None, :, :], axis=-1)    # (Bb, Cr)
    h = jnp.maximum(h, 0.0)
    s = jnp.sum(h[:, None, :] * w2_ref[...][None, :, :], axis=-1)    # (Bb, C)
    s = jax.nn.sigmoid(s)

    # scale: re-read x and multiply in the input dtype, broadcasting the gate
    # across the spatial (lane) axis.  Exact for f32 inputs.
    o_ref[...] = x_ref[...] * s.astype(o_ref.dtype)[:, :, None]


def _tpu_generation():
    """Return (tensorcores_per_chip, vmem_cap_bytes) for the attached TPU."""
    kind = ""
    try:
        kind = (getattr(jax.devices()[0], "device_kind", "") or "").lower()
    except Exception:
        pass
    if "v7" in kind:
        return 2, 48 << 20      # 64 MiB physical per TC -> leave headroom
    if "v5" in kind or "v6" in kind:
        return 1, 96 << 20      # single TC, 128 MiB physical
    return 1, 64 << 20          # unknown generation: be conservative


def _choose_block_batch(B, per_elem_bytes, num_cores, max_fit,
                        target_bytes=4 << 20, min_split_bytes=1 << 20):
    """How many batch elements to fuse per grid step.

    Largest bb that divides B, fits the VMEM budget (max_fit elements) and
    targets ~4 MiB per pipeline buffer.  On 2-TC chips (v7x) prefer >= 2 grid
    steps so the batch axis can shard across cores, but only when that keeps
    tiles >= ~1 MiB; on single-TC chips the whole batch is fused when it fits.
    """
    bb = max(1, min(B, max_fit, target_bytes // max(per_elem_bytes, 1)))
    while B % bb:
        bb -= 1
    if num_cores >= 2 and B >= num_cores:
        bb_split = bb
        while bb_split > 1 and B // bb_split < num_cores:
            bb_split -= 1
        while B % bb_split:
            bb_split -= 1
        if bb_split * per_elem_bytes >= min_split_bytes:
            bb = bb_split
    return bb


def se_module(x, w1, w2):
    """x: (B, C, H, W) NCHW; w1: (Cr, C) fc1 weight; w2: (C, Cr) fc2 weight."""
    B, C, H, W = x.shape
    HW = H * W
    Cr = w1.shape[0]

    # Free contiguous view NCHW -> (B, C, HW): channels on sublanes, HW on
    # lanes.  For SE placements where HW % 128 != 0 the final store becomes a
    # masked vst.msk (still correct); lane-dense padding/relayout is follow-up.
    xr = x.reshape(B, C, HW)
    w1f = w1.astype(jnp.float32)    # tiny, resident: pre-cast outside kernel
    w2f = w2.astype(jnp.float32)

    num_cores, vmem_cap = _tpu_generation()
    itemsize = jnp.dtype(x.dtype).itemsize
    per_elem_bytes = C * HW * itemsize
    w_bytes = 2 * (C * Cr) * 4
    slack = 4 << 20

    # Per fused batch element: in + out tiles, double-buffered (4x), plus one
    # f32 transient for the squeeze/scale math.
    per_bb_cost = C * HW * (4 * itemsize + 4)
    max_fit = (vmem_cap - 2 * w_bytes - slack) // max(per_bb_cost, 1)
    if max_fit < 1:
        # TODO(synk): add a two-phase HW-tiled path (phase 0 accumulates
        # channel sums over HW tiles, phase 1 rescales) for shapes whose
        # single-batch-element tile exceeds VMEM (relevant on v7x).
        raise ValueError(
            f"SE tile for one batch element ({per_bb_cost} B) exceeds the "
            f"VMEM budget ({vmem_cap} B); HW-tiled fallback not implemented.")

    bb = _choose_block_batch(B, per_elem_bytes, num_cores, int(max_fit))
    grid = (B // bb,)

    tile_bytes = bb * C * HW * itemsize
    needed = 4 * tile_bytes + bb * C * HW * 4 + 2 * w_bytes + slack
    vmem_limit = int(min(vmem_cap, max(needed, 16 << 20)))

    cost = pl.CostEstimate(
        flops=int(2 * B * C * HW + 4 * B * C * Cr + 2 * B * C),
        transcendentals=int(B * C),
        bytes_accessed=int(2 * B * C * HW * itemsize + w_bytes),
    )

    out = pl.pallas_call(
        se_kernel,
        out_shape=jax.ShapeDtypeStruct((B, C, HW), x.dtype),
        grid_spec=pltpu.PrefetchScalarGridSpec(
            num_scalar_prefetch=0,
            grid=grid,
            in_specs=[
                pl.BlockSpec((bb, C, HW), lambda b: (b, 0, 0)),
                pl.BlockSpec((Cr, C), lambda b: (0, 0)),
                pl.BlockSpec((C, Cr), lambda b: (0, 0)),
            ],
            out_specs=pl.BlockSpec((bb, C, HW), lambda b: (b, 0, 0)),
        ),
        compiler_params=pltpu.CompilerParams(
            dimension_semantics=("parallel",),
            vmem_limit_bytes=vmem_limit,
        ),
        cost_estimate=cost,
    )(xr, w1f, w2f)

    # Free contiguous view back to NCHW.
    return out.reshape(B, C, H, W)


def se_reference(x, w1, w2):
    """Pure-JAX reference mirroring the PyTorch module."""
    y = jnp.mean(x.astype(jnp.float32), axis=(2, 3))          # (B, C)
    y = jnp.maximum(y @ w1.T.astype(jnp.float32), 0.0)        # (B, Cr)
    y = jax.nn.sigmoid(y @ w2.T.astype(jnp.float32))          # (B, C)
    return (x.astype(jnp.float32) * y[:, :, None, None]).astype(x.dtype)


if __name__ == "__main__":
    # SEModule(channels=64, reduction=16) -> hidden = 64 // 16 = 4
    B, C, H, W = 2, 64, 16, 16
    reduction = 16
    Cr = C // reduction

    key = jax.random.PRNGKey(0)
    kx, k1, k2 = jax.random.split(key, 3)
    x = jax.random.normal(kx, (B, C, H, W), dtype=jnp.float32)
    # deterministic synthetic weights (PyTorch Linear weight shapes: (out, in))
    w1 = jax.random.normal(k1, (Cr, C), dtype=jnp.float32) * 0.1
    w2 = jax.random.normal(k2, (C, Cr), dtype=jnp.float32) * 0.1

    out = jax.block_until_ready(se_module(x, w1, w2))
    ref = jax.block_until_ready(se_reference(x, w1, w2))

    assert out.shape == (B, C, H, W)
    assert jnp.allclose(out, ref, atol=1e-5, rtol=1e-5), "mismatch vs reference"
    print("KERNEL_OK")
</pallas_src>

<mosaic_0001>
module attributes {stable_mosaic.version = 11 : i64} {
  func.func @se_kernel(%arg0: i32, %arg1: memref<2x64x256xf32, #tpu.memory_space<vmem>>, %arg2: memref<4x64xf32, #tpu.memory_space<vmem>>, %arg3: memref<64x4xf32, #tpu.memory_space<vmem>>, %arg4: memref<2x64x256xf32, #tpu.memory_space<vmem>>) attributes {dimension_semantics = [#tpu.dimension_semantics<parallel>], iteration_bounds = array<i64: 1>, scalar_prefetch = 0 : i64, scratch_operands = 0 : i64, tpu.core_type = #tpu.core_type<tc>, window_params = [{transform_indices = @transform_0, window_bounds = array<i64: 2, 64, 256>}, {pipeline_mode = #tpu.pipeline_mode<synchronous>, transform_indices = @transform_1, window_bounds = array<i64: 4, 64>}, {pipeline_mode = #tpu.pipeline_mode<synchronous>, transform_indices = @transform_2, window_bounds = array<i64: 64, 4>}, {transform_indices = @transform_3, window_bounds = array<i64: 2, 64, 256>}]} {
    %c0 = arith.constant 0 : index
    %c0_0 = arith.constant 0 : index
    %c0_1 = arith.constant 0 : index
    %0 = vector.load %arg1[%c0, %c0_0, %c0_1] : memref<2x64x256xf32, #tpu.memory_space<vmem>>, vector<2x64x256xf32>
    %cst = arith.constant dense<0.000000e+00> : vector<2x64xf32>
    %1 = vector.multi_reduction <add>, %0, %cst [2] : vector<2x64x256xf32> to vector<2x64xf32>
    %cst_2 = arith.constant 2.560000e+02 : f32
    %2 = vector.broadcast %cst_2 : f32 to vector<2x64xf32>
    %3 = arith.divf %1, %2 : vector<2x64xf32>
    %4 = vector.shape_cast %3 : vector<2x64xf32> to vector<2x1x64xf32>
    %c0_3 = arith.constant 0 : index
    %c0_4 = arith.constant 0 : index
    %5 = vector.load %arg2[%c0_3, %c0_4] : memref<4x64xf32, #tpu.memory_space<vmem>>, vector<4x64xf32>
    %6 = vector.shape_cast %5 : vector<4x64xf32> to vector<1x4x64xf32>
    %7 = vector.broadcast %4 : vector<2x1x64xf32> to vector<2x4x64xf32>
    %8 = vector.broadcast %6 : vector<1x4x64xf32> to vector<2x4x64xf32>
    %9 = arith.mulf %7, %8 : vector<2x4x64xf32>
    %cst_5 = arith.constant dense<0.000000e+00> : vector<2x4xf32>
    %10 = vector.multi_reduction <add>, %9, %cst_5 [2] : vector<2x4x64xf32> to vector<2x4xf32>
    %cst_6 = arith.constant 0.000000e+00 : f32
    %11 = vector.broadcast %cst_6 : f32 to vector<2x4xf32>
    %12 = arith.maximumf %10, %11 : vector<2x4xf32>
    %13 = vector.shape_cast %12 : vector<2x4xf32> to vector<2x1x4xf32>
    %c0_7 = arith.constant 0 : index
    %c0_8 = arith.constant 0 : index
    %14 = vector.load %arg3[%c0_7, %c0_8] : memref<64x4xf32, #tpu.memory_space<vmem>>, vector<64x4xf32>
    %15 = vector.shape_cast %14 : vector<64x4xf32> to vector<1x64x4xf32>
    %16 = vector.broadcast %13 : vector<2x1x4xf32> to vector<2x64x4xf32>
    %17 = vector.broadcast %15 : vector<1x64x4xf32> to vector<2x64x4xf32>
    %18 = arith.mulf %16, %17 : vector<2x64x4xf32>
    %cst_9 = arith.constant dense<0.000000e+00> : vector<2x64xf32>
    %19 = vector.multi_reduction <add>, %18, %cst_9 [2] : vector<2x64x4xf32> to vector<2x64xf32>
    %20 = arith.negf %19 : vector<2x64xf32>
    %21 = math.exp %20 : vector<2x64xf32>
    %cst_10 = arith.constant 1.000000e+00 : f32
    %22 = vector.broadcast %cst_10 : f32 to vector<2x64xf32>
    %23 = arith.addf %22, %21 : vector<2x64xf32>
    %24 = arith.divf %22, %23 : vector<2x64xf32>
    %c0_11 = arith.constant 0 : index
    %c0_12 = arith.constant 0 : index
    %c0_13 = arith.constant 0 : index
    %25 = vector.load %arg1[%c0_11, %c0_12, %c0_13] : memref<2x64x256xf32, #tpu.memory_space<vmem>>, vector<2x64x256xf32>
    %26 = vector.shape_cast %24 : vector<2x64xf32> to vector<2x64x1xf32>
    %27 = vector.broadcast %26 : vector<2x64x1xf32> to vector<2x64x256xf32>
    %28 = arith.mulf %25, %27 : vector<2x64x256xf32>
    %c0_14 = arith.constant 0 : index
    %c0_15 = arith.constant 0 : index
    %c0_16 = arith.constant 0 : index
    %29 = vector.load %arg4[%c0_14, %c0_15, %c0_16] : memref<2x64x256xf32, #tpu.memory_space<vmem>>, vector<2x64x256xf32>
    tpu.vector_store %arg4[%c0_14, %c0_15, %c0_16], %28 {strides = array<i32>} : memref<2x64x256xf32, #tpu.memory_space<vmem>>, vector<2x64x256xf32>,
    return
  }
  func.func @transform_0(%arg0: i32) -> (i32, i32, i32) {
    %c0_i32 = arith.constant 0 : i32
    %c0_i32_0 = arith.constant 0 : i32
    %c0_i32_1 = arith.constant 0 : i32
    return %arg0, %c0_i32, %c0_i32_0 : i32, i32, i32
  }
  func.func @transform_1(%arg0: i32) -> (i32, i32) {
    %c0_i32 = arith.constant 0 : i32
    %c0_i32_0 = arith.constant 0 : i32
    %c0_i32_1 = arith.constant 0 : i32
    return %c0_i32, %c0_i32_0 : i32, i32
  }
  func.func @transform_2(%arg0: i32) -> (i32, i32) {
    %c0_i32 = arith.constant 0 : i32
    %c0_i32_0 = arith.constant 0 : i32
    %c0_i32_1 = arith.constant 0 : i32
    return %c0_i32, %c0_i32_0 : i32, i32
  }
  func.func @transform_3(%arg0: i32) -> (i32, i32, i32) {
    %c0_i32 = arith.constant 0 : i32
    %c0_i32_0 = arith.constant 0 : i32
    %c0_i32_1 = arith.constant 0 : i32
    return %arg0, %c0_i32, %c0_i32_0 : i32, i32, i32
  }
}

</mosaic_0001>

<llo_original>
// kernel: tpu_custom_call.1
$region0: #{tpu_custom_call.1}
  #allocation0 [shape = 'u32[]', space=smem, size = 0x4, offset = 0x4, fixed_abs, tag = 'smem constant byte address 0x4 - core index']
  #allocation1 [shape = 'u32[144,128]{1,0:T(1,128)}', space=vmem, size = 0x12000, scoped, tag = 'internal scratch']
  %s0 = inlined_call_operand.hbm [shape: f32[2,64,256], index: 0, kind: input, shape index: {}]
  %s1 = inlined_call_operand.vmem [shape: f32[4,64], index: 1, kind: input, shape index: {}]
  %s2 = inlined_call_operand.vmem [shape: f32[64,4], index: 2, kind: input, shape index: {}]
  %s3 = inlined_call_operand.hbm [shape: f32[2,64,256], index: 3, kind: output, shape index: {}]
  %s4 = sld [smem:[#allocation0]]
  $region26: #{tpu_custom_call.1} parent=0
    _
  %s6 = ssub.s32 1, %s4
  %s7 = scalar_select 0, %s6, %s4
  $region1: #{tpu_custom_call.1} parent=0
    #allocation2 [shape = 'u8[131072]{0}', space=vmem, size = 0x20000, scoped, tag = 'input window, operand 0, single buffered']
    #allocation3 [shape = 's32[1]{0}', space=sflag, size = 0x4, scoped, tag = 'scoped memory for tpu_custom_call.1']
    #allocation4 [shape = 's32[1]{0}', space=sflag, size = 0x4, scoped, tag = 'scoped memory for tpu_custom_call.1']
    #allocation5 [shape = 'u8[131072]{0}', space=vmem, size = 0x20000, scoped, tag = 'output window, operand 0, single buffered']
    %8 = vsyncpa [#allocation3], 0
    %9 = vsyncpa [#allocation4], 0
    // Predicated region
    $region2: #{tpu_custom_call.1} parent=1 // pred_check
      _
    $region3: #{tpu_custom_call.1} parent=1 // pred_check_branch
      %11 = sbr.rel (0) target = $region5
    $region4: #{tpu_custom_call.1} parent=1 // pred_region
      %s13 = ssub.s32 4096, 4096
      %14 = vsyncadd [#allocation3], %s13
      %s15 = sshll.u32 [#allocation2], 4
      %s16 = int_to_ptr.vmem [resolvable:$true] %s15
      %21 = dma.hbm_to_vmem [thread:$0]  %s0, 4096, %s16, [#allocation3], 256, 256, 16
    $region5: #{tpu_custom_call.1} parent=1 // pred_fallthru
      _
    // Predicated region
    $region6: #{tpu_custom_call.1} parent=1 // pred_check
      _
    $region7: #{tpu_custom_call.1} parent=1 // pred_check_branch
      %23 = sbr.rel (0) target = $region9
    $region8: #{tpu_custom_call.1} parent=1 // pred_region
      _
    $region9: #{tpu_custom_call.1} parent=1 // pred_fallthru
      _
    // Predicated region
    $region10: #{tpu_custom_call.1} parent=1 // pred_check
      _
    $region11: #{tpu_custom_call.1} parent=1 // pred_check_branch
      %25 = sbr.rel (0) target = $region13
    $region12: #{tpu_custom_call.1} parent=1 // pred_region
      _
    $region13: #{tpu_custom_call.1} parent=1 // pred_fallthru
      _
    // Predicated region
    $region14: #{tpu_custom_call.1} parent=1 // pred_check
      _
    $region15: #{tpu_custom_call.1} parent=1 // pred_check_branch
      %27 = sbr.rel (0) target = $region17
    $region16: #{tpu_custom_call.1} parent=1 // pred_region
      %28 = dma.done [#allocation3], 4096
    $region17: #{tpu_custom_call.1} parent=1 // pred_fallthru
      _
    %v29 = vld [vmem:[#allocation2] sm:$0xff]
    %v30 = vld [vmem:[#allocation2 + $0x8] sm:$0xff]
    %v31 = vld [vmem:[#allocation2 + $0x10] sm:$0xff]
    %v32 = vld [vmem:[#allocation2 + $0x18] sm:$0xff]
    %v33 = vld [vmem:[#allocation2 + $0x20] sm:$0xff]
    %v34 = vld [vmem:[#allocation2 + $0x28] sm:$0xff]
    %v35 = vld [vmem:[#allocation2 + $0x30] sm:$0xff]
    %v36 = vld [vmem:[#allocation2 + $0x38] sm:$0xff]
    %v37 = vld [vmem:[#allocation2 + $0x40] sm:$0xff]
    %v38 = vld [vmem:[#allocation2 + $0x48] sm:$0xff]
    %v39 = vld [vmem:[#allocation2 + $0x50] sm:$0xff]
    %v40 = vld [vmem:[#allocation2 + $0x58] sm:$0xff]
    %v41 = vld [vmem:[#allocation2 + $0x60] sm:$0xff]
    %v42 = vld [vmem:[#allocation2 + $0x68] sm:$0xff]
    %v43 = vld [vmem:[#allocation2 + $0x70] sm:$0xff]
    %v44 = vld [vmem:[#allocation2 + $0x78] sm:$0xff]
    %v45 = vld [vmem:[#allocation2 + $0x80] sm:$0xff]
    %v46 = vld [vmem:[#allocation2 + $0x88] sm:$0xff]
    %v47 = vld [vmem:[#allocation2 + $0x90] sm:$0xff]
    %v48 = vld [vmem:[#allocation2 + $0x98] sm:$0xff]
    %v49 = vld [vmem:[#allocation2 + $0xa0] sm:$0xff]
    %v50 = vld [vmem:[#allocation2 + $0xa8] sm:$0xff]
    %v51 = vld [vmem:[#allocation2 + $0xb0] sm:$0xff]
    %v52 = vld [vmem:[#allocation2 + $0xb8] sm:$0xff]
    %v53 = vld [vmem:[#allocation2 + $0xc0] sm:$0xff]
    %v54 = vld [vmem:[#allocation2 + $0xc8] sm:$0xff]
    %v55 = vld [vmem:[#allocation2 + $0xd0] sm:$0xff]
    %v56 = vld [vmem:[#allocation2 + $0xd8] sm:$0xff]
    %v57 = vld [vmem:[#allocation2 + $0xe0] sm:$0xff]
    %v58 = vld [vmem:[#allocation2 + $0xe8] sm:$0xff]
    %v59 = vld [vmem:[#allocation2 + $0xf0] sm:$0xff]
    %v60 = vld [vmem:[#allocation2 + $0xf8] sm:$0xff]
    %v61 = vadd.f32 %v29, %v30
    %62 = vadd.xlane.f32.xlu0 %v61
    %v63 = vpop.xlane.xlu0 %62
    %v64 = vadd.f32 %v31, %v32
    %65 = vadd.xlane.f32.xlu0 %v64
    %v66 = vpop.xlane.xlu0 %65
    %v67 = vadd.f32 %v33, %v34
    %68 = vadd.xlane.f32.xlu0 %v67
    %v69 = vpop.xlane.xlu0 %68
    %v70 = vadd.f32 %v35, %v36
    %71 = vadd.xlane.f32.xlu0 %v70
    %v72 = vpop.xlane.xlu0 %71
    %v73 = vadd.f32 %v37, %v38
    %74 = vadd.xlane.f32.xlu0 %v73
    %v75 = vpop.xlane.xlu0 %74
    %v76 = vadd.f32 %v39, %v40
    %77 = vadd.xlane.f32.xlu0 %v76
    %v78 = vpop.xlane.xlu0 %77
    %v79 = vadd.f32 %v41, %v42
    %80 = vadd.xlane.f32.xlu0 %v79
    %v81 = vpop.xlane.xlu0 %80
    %v82 = vadd.f32 %v43, %v44
    %83 = vadd.xlane.f32.xlu0 %v82
    %v84 = vpop.xlane.xlu0 %83
    %v85 = vadd.f32 %v45, %v46
    %86 = vadd.xlane.f32.xlu0 %v85
    %v87 = vpop.xlane.xlu0 %86
    %v88 = vadd.f32 %v47, %v48
    %89 = vadd.xlane.f32.xlu0 %v88
    %v90 = vpop.xlane.xlu0 %89
    %v91 = vadd.f32 %v49, %v50
    %92 = vadd.xlane.f32.xlu0 %v91
    %v93 = vpop.xlane.xlu0 %92
    %v94 = vadd.f32 %v51, %v52
    %95 = vadd.xlane.f32.xlu0 %v94
    %v96 = vpop.xlane.xlu0 %95
    %v97 = vadd.f32 %v53, %v54
    %98 = vadd.xlane.f32.xlu0 %v97
    %v99 = vpop.xlane.xlu0 %98
    %v100 = vadd.f32 %v55, %v56
    %101 = vadd.xlane.f32.xlu0 %v100
    %v102 = vpop.xlane.xlu0 %101
    %v103 = vadd.f32 %v57, %v58
    %104 = vadd.xlane.f32.xlu0 %v103
    %v105 = vpop.xlane.xlu0 %104
    %v106 = vadd.f32 %v59, %v60
    %107 = vadd.xlane.f32.xlu0 %v106
    %v108 = vpop.xlane.xlu0 %107
    %v109 = vrcp.pop 256.0
    %v110 = vmul.f32 %v63, %v109
    %v111 = vmul.f32 %v66, %v109
    %v112 = vmul.f32 %v69, %v109
    %v113 = vmul.f32 %v72, %v109
    %v114 = vmul.f32 %v75, %v109
    %v115 = vmul.f32 %v78, %v109
    %v116 = vmul.f32 %v81, %v109
    %v117 = vmul.f32 %v84, %v109
    %v118 = vmul.f32 %v87, %v109
    %v119 = vmul.f32 %v90, %v109
    %v120 = vmul.f32 %v93, %v109
    %v121 = vmul.f32 %v96, %v109
    %v122 = vmul.f32 %v99, %v109
    %v123 = vmul.f32 %v102, %v109
    %v124 = vmul.f32 %v105, %v109
    %v125 = vmul.f32 %v108, %v109
    %v126 = vld [vmem:[%s1] sm:$0xf]
    %v128 = vlaneseq
    %v129 = vshrl.u32 %v128, 7
    %v130 = vsub.s32 0, %v129
    %v131 = vrot.slane %v126, %v130
    %133 = vbcast.lane.b32.xlu0 %v131, 256
    %v134 = vpop.permute.xlu0 %133
    %s136 = sor.u32 256, 8
    %137 = vbcast.lane.b32.xlu0 %v131, %s136
    %v138 = vpop.permute.xlu0 %137
    %s140 = sor.u32 256, 16
    %141 = vbcast.lane.b32.xlu0 %v131, %s140
    %v142 = vpop.permute.xlu0 %141
    %s144 = sor.u32 256, 24
    %145 = vbcast.lane.b32.xlu0 %v131, %s144
    %v146 = vpop.permute.xlu0 %145
    %s148 = sor.u32 256, 32
    %149 = vbcast.lane.b32.xlu0 %v131, %s148
    %v150 = vpop.permute.xlu0 %149
    %s152 = sor.u32 256, 40
    %153 = vbcast.lane.b32.xlu0 %v131, %s152
    %v154 = vpop.permute.xlu0 %153
    %s156 = sor.u32 256, 48
    %157 = vbcast.lane.b32.xlu0 %v131, %s156
    %v158 = vpop.permute.xlu0 %157
    %s160 = sor.u32 256, 56
    %161 = vbcast.lane.b32.xlu0 %v131, %s160
    %v162 = vpop.permute.xlu0 %161
    %v163 = vlaneseq
    %v164 = vshrl.u32 %v163, 7
    %v165 = vsub.s32 1, %v164
    %v166 = vrot.slane %v126, %v165
    %168 = vbcast.lane.b32.xlu0 %v166, 256
    %v169 = vpop.permute.xlu0 %168
    %s171 = sor.u32 256, 8
    %172 = vbcast.lane.b32.xlu0 %v166, %s171
    %v173 = vpop.permute.xlu0 %172
    %s175 = sor.u32 256, 16
    %176 = vbcast.lane.b32.xlu0 %v166, %s175
    %v177 = vpop.permute.xlu0 %176
    %s179 = sor.u32 256, 24
    %180 = vbcast.lane.b32.xlu0 %v166, %s179
    %v181 = vpop.permute.xlu0 %180
    %s183 = sor.u32 256, 32
    %184 = vbcast.lane.b32.xlu0 %v166, %s183
    %v185 = vpop.permute.xlu0 %184
    %s187 = sor.u32 256, 40
    %188 = vbcast.lane.b32.xlu0 %v166, %s187
    %v189 = vpop.permute.xlu0 %188
    %s191 = sor.u32 256, 48
    %192 = vbcast.lane.b32.xlu0 %v166, %s191
    %v193 = vpop.permute.xlu0 %192
    %s195 = sor.u32 256, 56
    %196 = vbcast.lane.b32.xlu0 %v166, %s195
    %v197 = vpop.permute.xlu0 %196
    %v198 = vlaneseq
    %v199 = vshrl.u32 %v198, 7
    %v200 = vsub.s32 2, %v199
    %v201 = vrot.slane %v126, %v200
    %203 = vbcast.lane.b32.xlu0 %v201, 256
    %v204 = vpop.permute.xlu0 %203
    %s206 = sor.u32 256, 8
    %207 = vbcast.lane.b32.xlu0 %v201, %s206
    %v208 = vpop.permute.xlu0 %207
    %s210 = sor.u32 256, 16
    %211 = vbcast.lane.b32.xlu0 %v201, %s210
    %v212 = vpop.permute.xlu0 %211
    %s214 = sor.u32 256, 24
    %215 = vbcast.lane.b32.xlu0 %v201, %s214
    %v216 = vpop.permute.xlu0 %215
    %s218 = sor.u32 256, 32
    %219 = vbcast.lane.b32.xlu0 %v201, %s218
    %v220 = vpop.permute.xlu0 %219
    %s222 = sor.u32 256, 40
    %223 = vbcast.lane.b32.xlu0 %v201, %s222
    %v224 = vpop.permute.xlu0 %223
    %s226 = sor.u32 256, 48
    %227 = vbcast.lane.b32.xlu0 %v201, %s226
    %v228 = vpop.permute.xlu0 %227
    %s230 = sor.u32 256, 56
    %231 = vbcast.lane.b32.xlu0 %v201, %s230
    %v232 = vpop.permute.xlu0 %231
    %v233 = vlaneseq
    %v234 = vshrl.u32 %v233, 7
    %v235 = vsub.s32 3, %v234
    %v236 = vrot.slane %v126, %v235
    %238 = vbcast.lane.b32.xlu0 %v236, 256
    %v239 = vpop.permute.xlu0 %238
    %s241 = sor.u32 256, 8
    %242 = vbcast.lane.b32.xlu0 %v236, %s241
    %v243 = vpop.permute.xlu0 %242
    %s245 = sor.u32 256, 16
    %246 = vbcast.lane.b32.xlu0 %v236, %s245
    %v247 = vpop.permute.xlu0 %246
    %s249 = sor.u32 256, 24
    %250 = vbcast.lane.b32.xlu0 %v236, %s249
    %v251 = vpop.permute.xlu0 %250
    %s253 = sor.u32 256, 32
    %254 = vbcast.lane.b32.xlu0 %v236, %s253
    %v255 = vpop.permute.xlu0 %254
    %s257 = sor.u32 256, 40
    %258 = vbcast.lane.b32.xlu0 %v236, %s257
    %v259 = vpop.permute.xlu0 %258
    %s261 = sor.u32 256, 48
    %262 = vbcast.lane.b32.xlu0 %v236, %s261
    %v263 = vpop.permute.xlu0 %262
    %s265 = sor.u32 256, 56
    %266 = vbcast.lane.b32.xlu0 %v236, %s265
    %v267 = vpop.permute.xlu0 %266
    %v300 = vmul.f32 %v110, %v134
    %v301 = vmul.f32 %v111, %v138
    %v302 = vmul.f32 %v112, %v142
    %v303 = vmul.f32 %v113, %v146
    %v304 = vmul.f32 %v114, %v150
    %v305 = vmul.f32 %v115, %v154
    %v306 = vmul.f32 %v116, %v158
    %v307 = vmul.f32 %v117, %v162
    %v308 = vmul.f32 %v110, %v169
    %v309 = vmul.f32 %v111, %v173
    %v310 = vmul.f32 %v112, %v177
    %v311 = vmul.f32 %v113, %v181
    %v312 = vmul.f32 %v114, %v185
    %v313 = vmul.f32 %v115, %v189
    %v314 = vmul.f32 %v116, %v193
    %v315 = vmul.f32 %v117, %v197
    %v316 = vmul.f32 %v110, %v204
    %v317 = vmul.f32 %v111, %v208
    %v318 = vmul.f32 %v112, %v212
    %v319 = vmul.f32 %v113, %v216
    %v320 = vmul.f32 %v114, %v220
    %v321 = vmul.f32 %v115, %v224
    %v322 = vmul.f32 %v116, %v228
    %v323 = vmul.f32 %v117, %v232
    %v324 = vmul.f32 %v110, %v239
    %v325 = vmul.f32 %v111, %v243
    %v326 = vmul.f32 %v112, %v247
    %v327 = vmul.f32 %v113, %v251
    %v328 = vmul.f32 %v114, %v255
    %v329 = vmul.f32 %v115, %v259
    %v330 = vmul.f32 %v116, %v263
    %v331 = vmul.f32 %v117, %v267
    %v332 = vmul.f32 %v118, %v134
    %v333 = vmul.f32 %v119, %v138
    %v334 = vmul.f32 %v120, %v142
    %v335 = vmul.f32 %v121, %v146
    %v336 = vmul.f32 %v122, %v150
    %v337 = vmul.f32 %v123, %v154
    %v338 = vmul.f32 %v124, %v158
    %v339 = vmul.f32 %v125, %v162
    %v340 = vmul.f32 %v118, %v169
    %v341 = vmul.f32 %v119, %v173
    %v342 = vmul.f32 %v120, %v177
    %v343 = vmul.f32 %v121, %v181
    %v344 = vmul.f32 %v122, %v185
    %v345 = vmul.f32 %v123, %v189
    %v346 = vmul.f32 %v124, %v193
    %v347 = vmul.f32 %v125, %v197
    %v348 = vmul.f32 %v118, %v204
    %v349 = vmul.f32 %v119, %v208
    %v350 = vmul.f32 %v120, %v212
    %v351 = vmul.f32 %v121, %v216
    %v352 = vmul.f32 %v122, %v220
    %v353 = vmul.f32 %v123, %v224
    %v354 = vmul.f32 %v124, %v228
    %v355 = vmul.f32 %v125, %v232
    %v356 = vmul.f32 %v118, %v239
    %v357 = vmul.f32 %v119, %v243
    %v358 = vmul.f32 %v120, %v247
    %v359 = vmul.f32 %v121, %v251
    %v360 = vmul.f32 %v122, %v255
    %v361 = vmul.f32 %v123, %v259
    %v362 = vmul.f32 %v124, %v263
    %v363 = vmul.f32 %v125, %v267
    %428 = vset.pattern.permute.xlu0 0
    %429 = vperm.xlu0 %428, %v300
    %v430 = vpop.permute.xlu0 %429
    %431 = vset.pattern.permute.xlu0 0
    %432 = vperm.xlu0 %431, %v301
    %v433 = vpop.permute.xlu0 %432
    %434 = vset.pattern.permute.xlu0 0
    %435 = vperm.xlu0 %434, %v302
    %v436 = vpop.permute.xlu0 %435
    %437 = vset.pattern.permute.xlu0 0
    %438 = vperm.xlu0 %437, %v303
    %v439 = vpop.permute.xlu0 %438
    %440 = vset.pattern.permute.xlu0 0
    %441 = vperm.xlu0 %440, %v304
    %v442 = vpop.permute.xlu0 %441
    %443 = vset.pattern.permute.xlu0 0
    %444 = vperm.xlu0 %443, %v305
    %v445 = vpop.permute.xlu0 %444
    %446 = vset.pattern.permute.xlu0 0
    %447 = vperm.xlu0 %446, %v306
    %v448 = vpop.permute.xlu0 %447
    %449 = vset.pattern.permute.xlu0 0
    %450 = vperm.xlu0 %449, %v307
    %v451 = vpop.permute.xlu0 %450
    %452 = vset.pattern.permute.xlu0 0
    %453 = vperm.xlu0 %452, %v308
    %v454 = vpop.permute.xlu0 %453
    %455 = vset.pattern.permute.xlu0 0
    %456 = vperm.xlu0 %455, %v309
    %v457 = vpop.permute.xlu0 %456
    %458 = vset.pattern.permute.xlu0 0
    %459 = vperm.xlu0 %458, %v310
    %v460 = vpop.permute.xlu0 %459
    %461 = vset.pattern.permute.xlu0 0
    %462 = vperm.xlu0 %461, %v311
    %v463 = vpop.permute.xlu0 %462
    %464 = vset.pattern.permute.xlu0 0
    %465 = vperm.xlu0 %464, %v312
    %v466 = vpop.permute.xlu0 %465
    %467 = vset.pattern.permute.xlu0 0
    %468 = vperm.xlu0 %467, %v313
    %v469 = vpop.permute.xlu0 %468
    %470 = vset.pattern.permute.xlu0 0
    %471 = vperm.xlu0 %470, %v314
    %v472 = vpop.permute.xlu0 %471
    %473 = vset.pattern.permute.xlu0 0
    %474 = vperm.xlu0 %473, %v315
    %v475 = vpop.permute.xlu0 %474
    %476 = vset.pattern.permute.xlu0 0
    %477 = vperm.xlu0 %476, %v316
    %v478 = vpop.permute.xlu0 %477
    %479 = vset.pattern.permute.xlu0 0
    %480 = vperm.xlu0 %479, %v317
    %v481 = vpop.permute.xlu0 %480
    %482 = vset.pattern.permute.xlu0 0
    %483 = vperm.xlu0 %482, %v318
    %v484 = vpop.permute.xlu0 %483
    %485 = vset.pattern.permute.xlu0 0
    %486 = vperm.xlu0 %485, %v319
    %v487 = vpop.permute.xlu0 %486
    %488 = vset.pattern.permute.xlu0 0
    %489 = vperm.xlu0 %488, %v320
    %v490 = vpop.permute.xlu0 %489
    %491 = vset.pattern.permute.xlu0 0
    %492 = vperm.xlu0 %491, %v321
    %v493 = vpop.permute.xlu0 %492
    %494 = vset.pattern.permute.xlu0 0
    %495 = vperm.xlu0 %494, %v322
    %v496 = vpop.permute.xlu0 %495
    %497 = vset.pattern.permute.xlu0 0
    %498 = vperm.xlu0 %497, %v323
    %v499 = vpop.permute.xlu0 %498
    %500 = vset.pattern.permute.xlu0 0
    %501 = vperm.xlu0 %500, %v324
    %v502 = vpop.permute.xlu0 %501
    %503 = vset.pattern.permute.xlu0 0
    %504 = vperm.xlu0 %503, %v325
    %v505 = vpop.permute.xlu0 %504
    %506 = vset.pattern.permute.xlu0 0
    %507 = vperm.xlu0 %506, %v326
    %v508 = vpop.permute.xlu0 %507
    %509 = vset.pattern.permute.xlu0 0
    %510 = vperm.xlu0 %509, %v327
    %v511 = vpop.permute.xlu0 %510
    %512 = vset.pattern.permute.xlu0 0
    %513 = vperm.xlu0 %512, %v328
    %v514 = vpop.permute.xlu0 %513
    %515 = vset.pattern.permute.xlu0 0
    %516 = vperm.xlu0 %515, %v329
    %v517 = vpop.permute.xlu0 %516
    %518 = vset.pattern.permute.xlu0 0
    %519 = vperm.xlu0 %518, %v330
    %v520 = vpop.permute.xlu0 %519
    %521 = vset.pattern.permute.xlu0 0
    %522 = vperm.xlu0 %521, %v331
    %v523 = vpop.permute.xlu0 %522
    %524 = vset.pattern.permute.xlu0 0
    %525 = vperm.xlu0 %524, %v332
    %v526 = vpop.permute.xlu0 %525
    %527 = vset.pattern.permute.xlu0 0
    %528 = vperm.xlu0 %527, %v333
    %v529 = vpop.permute.xlu0 %528
    %530 = vset.pattern.permute.xlu0 0
    %531 = vperm.xlu0 %530, %v334
    %v532 = vpop.permute.xlu0 %531
    %533 = vset.pattern.permute.xlu0 0
    %534 = vperm.xlu0 %533, %v335
    %v535 = vpop.permute.xlu0 %534
    %536 = vset.pattern.permute.xlu0 0
    %537 = vperm.xlu0 %536, %v336
    %v538 = vpop.permute.xlu0 %537
    %539 = vset.pattern.permute.xlu0 0
    %540 = vperm.xlu0 %539, %v337
    %v541 = vpop.permute.xlu0 %540
    %542 = vset.pattern.permute.xlu0 0
    %543 = vperm.xlu0 %542, %v338
    %v544 = vpop.permute.xlu0 %543
    %545 = vset.pattern.permute.xlu0 0
    %546 = vperm.xlu0 %545, %v339
    %v547 = vpop.permute.xlu0 %546
    %548 = vset.pattern.permute.xlu0 0
    %549 = vperm.xlu0 %548, %v340
    %v550 = vpop.permute.xlu0 %549
    %551 = vset.pattern.permute.xlu0 0
    %552 = vperm.xlu0 %551, %v341
    %v553 = vpop.permute.xlu0 %552
    %554 = vset.pattern.permute.xlu0 0
    %555 = vperm.xlu0 %554, %v342
    %v556 = vpop.permute.xlu0 %555
    %557 = vset.pattern.permute.xlu0 0
    %558 = vperm.xlu0 %557, %v343
    %v559 = vpop.permute.xlu0 %558
    %560 = vset.pattern.permute.xlu0 0
    %561 = vperm.xlu0 %560, %v344
    %v562 = vpop.permute.xlu0 %561
    %563 = vset.pattern.permute.xlu0 0
    %564 = vperm.xlu0 %563, %v345
    %v565 = vpop.permute.xlu0 %564
    %566 = vset.pattern.permute.xlu0 0
    %567 = vperm.xlu0 %566, %v346
    %v568 = vpop.permute.xlu0 %567
    %569 = vset.pattern.permute.xlu0 0
    %570 = vperm.xlu0 %569, %v347
    %v571 = vpop.permute.xlu0 %570
    %572 = vset.pattern.permute.xlu0 0
    %573 = vperm.xlu0 %572, %v348
    %v574 = vpop.permute.xlu0 %573
    %575 = vset.pattern.permute.xlu0 0
    %576 = vperm.xlu0 %575, %v349
    %v577 = vpop.permute.xlu0 %576
    %578 = vset.pattern.permute.xlu0 0
    %579 = vperm.xlu0 %578, %v350
    %v580 = vpop.permute.xlu0 %579
    %581 = vset.pattern.permute.xlu0 0
    %582 = vperm.xlu0 %581, %v351
    %v583 = vpop.permute.xlu0 %582
    %584 = vset.pattern.permute.xlu0 0
    %585 = vperm.xlu0 %584, %v352
    %v586 = vpop.permute.xlu0 %585
    %587 = vset.pattern.permute.xlu0 0
    %588 = vperm.xlu0 %587, %v353
    %v589 = vpop.permute.xlu0 %588
    %590 = vset.pattern.permute.xlu0 0
    %591 = vperm.xlu0 %590, %v354
    %v592 = vpop.permute.xlu0 %591
    %593 = vset.pattern.permute.xlu0 0
    %594 = vperm.xlu0 %593, %v355
    %v595 = vpop.permute.xlu0 %594
    %596 = vset.pattern.permute.xlu0 0
    %597 = vperm.xlu0 %596, %v356
    %v598 = vpop.permute.xlu0 %597
    %599 = vset.pattern.permute.xlu0 0
    %600 = vperm.xlu0 %599, %v357
    %v601 = vpop.permute.xlu0 %600
    %602 = vset.pattern.permute.xlu0 0
    %603 = vperm.xlu0 %602, %v358
    %v604 = vpop.permute.xlu0 %603
    %605 = vset.pattern.permute.xlu0 0
    %606 = vperm.xlu0 %605, %v359
    %v607 = vpop.permute.xlu0 %606
    %608 = vset.pattern.permute.xlu0 0
    %609 = vperm.xlu0 %608, %v360
    %v610 = vpop.permute.xlu0 %609
    %611 = vset.pattern.permute.xlu0 0
    %612 = vperm.xlu0 %611, %v361
    %v613 = vpop.permute.xlu0 %612
    %614 = vset.pattern.permute.xlu0 0
    %615 = vperm.xlu0 %614, %v362
    %v616 = vpop.permute.xlu0 %615
    %617 = vset.pattern.permute.xlu0 0
    %618 = vperm.xlu0 %617, %v363
    %v619 = vpop.permute.xlu0 %618
    %v620 = vlaneseq
    %v621 = vand.u32 %v620, 127
    %v622 = vlaneseq
    %v623 = vshrl.u32 %v622, 7
    %v624 = vsub.s32 %v621, %v623
    %v625 = vrot.slane %v430, %v624
    %v626 = vadd.s32 %v621, 4294967288
    %v627 = vlaneseq
    %v628 = vshrl.u32 %v627, 7
    %v629 = vsub.s32 %v626, %v628
    %v630 = vrot.slane %v433, %v629
    %vm631 = vcmask 130112
    %v632 = vsel %vm631, %v630, %v625
    %v633 = vadd.s32 %v621, 4294967280
    %v634 = vlaneseq
    %v635 = vshrl.u32 %v634, 7
    %v636 = vsub.s32 %v633, %v635
    %v637 = vrot.slane %v436, %v636
    %vm638 = vcmask 195712
    %v639 = vsel %vm638, %v637, %v632
    %v640 = vadd.s32 %v621, 4294967272
    %v641 = vlaneseq
    %v642 = vshrl.u32 %v641, 7
    %v643 = vsub.s32 %v640, %v642
    %v644 = vrot.slane %v439, %v643
    %vm645 = vcmask 261312
    %v646 = vsel %vm645, %v644, %v639
    %v647 = vadd.s32 %v621, 4294967264
    %v648 = vlaneseq
    %v649 = vshrl.u32 %v648, 7
    %v650 = vsub.s32 %v647, %v649
    %v651 = vrot.slane %v442, %v650
    %vm652 = vcmask 326912
    %v653 = vsel %vm652, %v651, %v646
    %v654 = vadd.s32 %v621, 4294967256
    %v655 = vlaneseq
    %v656 = vshrl.u32 %v655, 7
    %v657 = vsub.s32 %v654, %v656
    %v658 = vrot.slane %v445, %v657
    %vm659 = vcmask 392512
    %v660 = vsel %vm659, %v658, %v653
    %v661 = vadd.s32 %v621, 4294967248
    %v662 = vlaneseq
    %v663 = vshrl.u32 %v662, 7
    %v664 = vsub.s32 %v661, %v663
    %v665 = vrot.slane %v448, %v664
    %vm666 = vcmask 458112
    %v667 = vsel %vm666, %v665, %v660
    %v668 = vadd.s32 %v621, 4294967240
    %v669 = vlaneseq
    %v670 = vshrl.u32 %v669, 7
    %v671 = vsub.s32 %v668, %v670
    %v672 = vrot.slane %v451, %v671
    %vm673 = vcmask 523712
    %v674 = vsel %vm673, %v672, %v667
    %v675 = vlaneseq
    %v676 = vshrl.u32 %v675, 7
    %v677 = vsub.s32 %v621, %v676
    %v678 = vrot.slane %v454, %v677
    %v679 = vlaneseq
    %v680 = vshrl.u32 %v679, 7
    %v681 = vsub.s32 %v626, %v680
    %v682 = vrot.slane %v457, %v681
    %v683 = vsel %vm631, %v682, %v678
    %v684 = vlaneseq
    %v685 = vshrl.u32 %v684, 7
    %v686 = vsub.s32 %v633, %v685
    %v687 = vrot.slane %v460, %v686
    %v688 = vsel %vm638, %v687, %v683
    %v689 = vlaneseq
    %v690 = vshrl.u32 %v689, 7
    %v691 = vsub.s32 %v640, %v690
    %v692 = vrot.slane %v463, %v691
    %v693 = vsel %vm645, %v692, %v688
    %v694 = vlaneseq
    %v695 = vshrl.u32 %v694, 7
    %v696 = vsub.s32 %v647, %v695
    %v697 = vrot.slane %v466, %v696
    %v698 = vsel %vm652, %v697, %v693
    %v699 = vlaneseq
    %v700 = vshrl.u32 %v699, 7
    %v701 = vsub.s32 %v654, %v700
    %v702 = vrot.slane %v469, %v701
    %v703 = vsel %vm659, %v702, %v698
    %v704 = vlaneseq
    %v705 = vshrl.u32 %v704, 7
    %v706 = vsub.s32 %v661, %v705
    %v707 = vrot.slane %v472, %v706
    %v708 = vsel %vm666, %v707, %v703
    %v709 = vlaneseq
    %v710 = vshrl.u32 %v709, 7
    %v711 = vsub.s32 %v668, %v710
    %v712 = vrot.slane %v475, %v711
    %v713 = vsel %vm673, %v712, %v708
    %v714 = vlaneseq
    %v715 = vshrl.u32 %v714, 7
    %v716 = vsub.s32 %v621, %v715
    %v717 = vrot.slane %v478, %v716
    %v718 = vlaneseq
    %v719 = vshrl.u32 %v718, 7
    %v720 = vsub.s32 %v626, %v719
    %v721 = vrot.slane %v481, %v720
    %v722 = vsel %vm631, %v721, %v717
    %v723 = vlaneseq
    %v724 = vshrl.u32 %v723, 7
    %v725 = vsub.s32 %v633, %v724
    %v726 = vrot.slane %v484, %v725
    %v727 = vsel %vm638, %v726, %v722
    %v728 = vlaneseq
    %v729 = vshrl.u32 %v728, 7
    %v730 = vsub.s32 %v640, %v729
    %v731 = vrot.slane %v487, %v730
    %v732 = vsel %vm645, %v731, %v727
    %v733 = vlaneseq
    %v734 = vshrl.u32 %v733, 7
    %v735 = vsub.s32 %v647, %v734
    %v736 = vrot.slane %v490, %v735
    %v737 = vsel %vm652, %v736, %v732
    %v738 = vlaneseq
    %v739 = vshrl.u32 %v738, 7
    %v740 = vsub.s32 %v654, %v739
    %v741 = vrot.slane %v493, %v740
    %v742 = vsel %vm659, %v741, %v737
    %v743 = vlaneseq
    %v744 = vshrl.u32 %v743, 7
    %v745 = vsub.s32 %v661, %v744
    %v746 = vrot.slane %v496, %v745
    %v747 = vsel %vm666, %v746, %v742
    %v748 = vlaneseq
    %v749 = vshrl.u32 %v748, 7
    %v750 = vsub.s32 %v668, %v749
    %v751 = vrot.slane %v499, %v750
    %v752 = vsel %vm673, %v751, %v747
    %v753 = vlaneseq
    %v754 = vshrl.u32 %v753, 7
    %v755 = vsub.s32 %v621, %v754
    %v756 = vrot.slane %v502, %v755
    %v757 = vlaneseq
    %v758 = vshrl.u32 %v757, 7
    %v759 = vsub.s32 %v626, %v758
    %v760 = vrot.slane %v505, %v759
    %v761 = vsel %vm631, %v760, %v756
    %v762 = vlaneseq
    %v763 = vshrl.u32 %v762, 7
    %v764 = vsub.s32 %v633, %v763
    %v765 = vrot.slane %v508, %v764
    %v766 = vsel %vm638, %v765, %v761
    %v767 = vlaneseq
    %v768 = vshrl.u32 %v767, 7
    %v769 = vsub.s32 %v640, %v768
    %v770 = vrot.slane %v511, %v769
    %v771 = vsel %vm645, %v770, %v766
    %v772 = vlaneseq
    %v773 = vshrl.u32 %v772, 7
    %v774 = vsub.s32 %v647, %v773
    %v775 = vrot.slane %v514, %v774
    %v776 = vsel %vm652, %v775, %v771
    %v777 = vlaneseq
    %v778 = vshrl.u32 %v777, 7
    %v779 = vsub.s32 %v654, %v778
    %v780 = vrot.slane %v517, %v779
    %v781 = vsel %vm659, %v780, %v776
    %v782 = vlaneseq
    %v783 = vshrl.u32 %v782, 7
    %v784 = vsub.s32 %v661, %v783
    %v785 = vrot.slane %v520, %v784
    %v786 = vsel %vm666, %v785, %v781
    %v787 = vlaneseq
    %v788 = vshrl.u32 %v787, 7
    %v789 = vsub.s32 %v668, %v788
    %v790 = vrot.slane %v523, %v789
    %v791 = vsel %vm673, %v790, %v786
    %v792 = vlaneseq
    %v793 = vshrl.u32 %v792, 7
    %v794 = vsub.s32 %v621, %v793
    %v795 = vrot.slane %v526, %v794
    %v796 = vlaneseq
    %v797 = vshrl.u32 %v796, 7
    %v798 = vsub.s32 %v626, %v797
    %v799 = vrot.slane %v529, %v798
    %v800 = vsel %vm631, %v799, %v795
    %v801 = vlaneseq
    %v802 = vshrl.u32 %v801, 7
    %v803 = vsub.s32 %v633, %v802
    %v804 = vrot.slane %v532, %v803
    %v805 = vsel %vm638, %v804, %v800
    %v806 = vlaneseq
    %v807 = vshrl.u32 %v806, 7
    %v808 = vsub.s32 %v640, %v807
    %v809 = vrot.slane %v535, %v808
    %v810 = vsel %vm645, %v809, %v805
    %v811 = vlaneseq
    %v812 = vshrl.u32 %v811, 7
    %v813 = vsub.s32 %v647, %v812
    %v814 = vrot.slane %v538, %v813
    %v815 = vsel %vm652, %v814, %v810
    %v816 = vlaneseq
    %v817 = vshrl.u32 %v816, 7
    %v818 = vsub.s32 %v654, %v817
    %v819 = vrot.slane %v541, %v818
    %v820 = vsel %vm659, %v819, %v815
    %v821 = vlaneseq
    %v822 = vshrl.u32 %v821, 7
    %v823 = vsub.s32 %v661, %v822
    %v824 = vrot.slane %v544, %v823
    %v825 = vsel %vm666, %v824, %v820
    %v826 = vlaneseq
    %v827 = vshrl.u32 %v826, 7
    %v828 = vsub.s32 %v668, %v827
    %v829 = vrot.slane %v547, %v828
    %v830 = vsel %vm673, %v829, %v825
    %v831 = vlaneseq
    %v832 = vshrl.u32 %v831, 7
    %v833 = vsub.s32 %v621, %v832
    %v834 = vrot.slane %v550, %v833
    %v835 = vlaneseq
    %v836 = vshrl.u32 %v835, 7
    %v837 = vsub.s32 %v626, %v836
    %v838 = vrot.slane %v553, %v837
    %v839 = vsel %vm631, %v838, %v834
    %v840 = vlaneseq
    %v841 = vshrl.u32 %v840, 7
    %v842 = vsub.s32 %v633, %v841
    %v843 = vrot.slane %v556, %v842
    %v844 = vsel %vm638, %v843, %v839
    %v845 = vlaneseq
    %v846 = vshrl.u32 %v845, 7
    %v847 = vsub.s32 %v640, %v846
    %v848 = vrot.slane %v559, %v847
    %v849 = vsel %vm645, %v848, %v844
    %v850 = vlaneseq
    %v851 = vshrl.u32 %v850, 7
    %v852 = vsub.s32 %v647, %v851
    %v853 = vrot.slane %v562, %v852
    %v854 = vsel %vm652, %v853, %v849
    %v855 = vlaneseq
    %v856 = vshrl.u32 %v855, 7
    %v857 = vsub.s32 %v654, %v856
    %v858 = vrot.slane %v565, %v857
    %v859 = vsel %vm659, %v858, %v854
    %v860 = vlaneseq
    %v861 = vshrl.u32 %v860, 7
    %v862 = vsub.s32 %v661, %v861
    %v863 = vrot.slane %v568, %v862
    %v864 = vsel %vm666, %v863, %v859
    %v865 = vlaneseq
    %v866 = vshrl.u32 %v865, 7
    %v867 = vsub.s32 %v668, %v866
    %v868 = vrot.slane %v571, %v867
    %v869 = vsel %vm673, %v868, %v864
    %v870 = vlaneseq
    %v871 = vshrl.u32 %v870, 7
    %v872 = vsub.s32 %v621, %v871
    %v873 = vrot.slane %v574, %v872
    %v874 = vlaneseq
    %v875 = vshrl.u32 %v874, 7
    %v876 = vsub.s32 %v626, %v875
    %v877 = vrot.slane %v577, %v876
    %v878 = vsel %vm631, %v877, %v873
    %v879 = vlaneseq
    %v880 = vshrl.u32 %v879, 7
    %v881 = vsub.s32 %v633, %v880
    %v882 = vrot.slane %v580, %v881
    %v883 = vsel %vm638, %v882, %v878
    %v884 = vlaneseq
    %v885 = vshrl.u32 %v884, 7
    %v886 = vsub.s32 %v640, %v885
    %v887 = vrot.slane %v583, %v886
    %v888 = vsel %vm645, %v887, %v883
    %v889 = vlaneseq
    %v890 = vshrl.u32 %v889, 7
    %v891 = vsub.s32 %v647, %v890
    %v892 = vrot.slane %v586, %v891
    %v893 = vsel %vm652, %v892, %v888
    %v894 = vlaneseq
    %v895 = vshrl.u32 %v894, 7
    %v896 = vsub.s32 %v654, %v895
    %v897 = vrot.slane %v589, %v896
    %v898 = vsel %vm659, %v897, %v893
    %v899 = vlaneseq
    %v900 = vshrl.u32 %v899, 7
    %v901 = vsub.s32 %v661, %v900
    %v902 = vrot.slane %v592, %v901
    %v903 = vsel %vm666, %v902, %v898
    %v904 = vlaneseq
    %v905 = vshrl.u32 %v904, 7
    %v906 = vsub.s32 %v668, %v905
    %v907 = vrot.slane %v595, %v906
    %v908 = vsel %vm673, %v907, %v903
    %v909 = vlaneseq
    %v910 = vshrl.u32 %v909, 7
    %v911 = vsub.s32 %v621, %v910
    %v912 = vrot.slane %v598, %v911
    %v913 = vlaneseq
    %v914 = vshrl.u32 %v913, 7
    %v915 = vsub.s32 %v626, %v914
    %v916 = vrot.slane %v601, %v915
    %v917 = vsel %vm631, %v916, %v912
    %v918 = vlaneseq
    %v919 = vshrl.u32 %v918, 7
    %v920 = vsub.s32 %v633, %v919
    %v921 = vrot.slane %v604, %v920
    %v922 = vsel %vm638, %v921, %v917
    %v923 = vlaneseq
    %v924 = vshrl.u32 %v923, 7
    %v925 = vsub.s32 %v640, %v924
    %v926 = vrot.slane %v607, %v925
    %v927 = vsel %vm645, %v926, %v922
    %v928 = vlaneseq
    %v929 = vshrl.u32 %v928, 7
    %v930 = vsub.s32 %v647, %v929
    %v931 = vrot.slane %v610, %v930
    %v932 = vsel %vm652, %v931, %v927
    %v933 = vlaneseq
    %v934 = vshrl.u32 %v933, 7
    %v935 = vsub.s32 %v654, %v934
    %v936 = vrot.slane %v613, %v935
    %v937 = vsel %vm659, %v936, %v932
    %v938 = vlaneseq
    %v939 = vshrl.u32 %v938, 7
    %v940 = vsub.s32 %v661, %v939
    %v941 = vrot.slane %v616, %v940
    %v942 = vsel %vm666, %v941, %v937
    %v943 = vlaneseq
    %v944 = vshrl.u32 %v943, 7
    %v945 = vsub.s32 %v668, %v944
    %v946 = vrot.slane %v619, %v945
    %v947 = vsel %vm673, %v946, %v942
    %vm948 = vcmask 1041409
    %v949 = vsel %vm948, %v713, %v674
    %vm950 = vcmask 1042434
    %v951 = vsel %vm950, %v752, %v949
    %vm952 = vcmask 1043459
    %v953 = vsel %vm952, %v791, %v951
    %v954 = vsel %vm948, %v869, %v830
    %v955 = vsel %vm950, %v908, %v954
    %v956 = vsel %vm952, %v947, %v955
    %vm959 = vcmask 519168
    %v960 = vsel %vm959, %v953, 0.0
    %961 = vadd.xlane.f32.xlu0 %v960
    %v962 = vpop.xlane.xlu0 %961
    %v963 = vsel %vm959, %v956, 0.0
    %964 = vadd.xlane.f32.xlu0 %v963
    %v965 = vpop.xlane.xlu0 %964
    %v966 = vmax.f32 %v962, 0.0
    %v967 = vmax.f32 %v965, 0.0
    %v968 = vld [vmem:[%s2] sm:$0xff]
    %v969 = vld [vmem:[%s2 + $0x8] sm:$0xff]
    %v970 = vld [vmem:[%s2 + $0x10] sm:$0xff]
    %v971 = vld [vmem:[%s2 + $0x18] sm:$0xff]
    %v972 = vld [vmem:[%s2 + $0x20] sm:$0xff]
    %v973 = vld [vmem:[%s2 + $0x28] sm:$0xff]
    %v974 = vld [vmem:[%s2 + $0x30] sm:$0xff]
    %v975 = vld [vmem:[%s2 + $0x38] sm:$0xff]
    %v984 = vlaneseq
    %v985 = vshrl.u32 %v984, 7
    %v986 = vsub.s32 0, %v985
    %v987 = vrot.slane %v968, %v986
    %989 = vbcast.lane.b32.xlu0 %v987, 256
    %v990 = vpop.permute.xlu0 %989
    %v991 = vlaneseq
    %v992 = vshrl.u32 %v991, 7
    %v993 = vsub.s32 1, %v992
    %v994 = vrot.slane %v968, %v993
    %996 = vbcast.lane.b32.xlu0 %v994, 256
    %v997 = vpop.permute.xlu0 %996
    %v998 = vlaneseq
    %v999 = vshrl.u32 %v998, 7
    %v1000 = vsub.s32 2, %v999
    %v1001 = vrot.slane %v968, %v1000
    %1003 = vbcast.lane.b32.xlu0 %v1001, 256
    %v1004 = vpop.permute.xlu0 %1003
    %v1005 = vlaneseq
    %v1006 = vshrl.u32 %v1005, 7
    %v1007 = vsub.s32 3, %v1006
    %v1008 = vrot.slane %v968, %v1007
    %1010 = vbcast.lane.b32.xlu0 %v1008, 256
    %v1011 = vpop.permute.xlu0 %1010
    %v1012 = vlaneseq
    %v1013 = vshrl.u32 %v1012, 7
    %v1014 = vsub.s32 4, %v1013
    %v1015 = vrot.slane %v968, %v1014
    %1017 = vbcast.lane.b32.xlu0 %v1015, 256
    %v1018 = vpop.permute.xlu0 %1017
    %v1019 = vlaneseq
    %v1020 = vshrl.u32 %v1019, 7
    %v1021 = vsub.s32 5, %v1020
    %v1022 = vrot.slane %v968, %v1021
    %1024 = vbcast.lane.b32.xlu0 %v1022, 256
    %v1025 = vpop.permute.xlu0 %1024
    %v1026 = vlaneseq
    %v1027 = vshrl.u32 %v1026, 7
    %v1028 = vsub.s32 6, %v1027
    %v1029 = vrot.slane %v968, %v1028
    %1031 = vbcast.lane.b32.xlu0 %v1029, 256
    %v1032 = vpop.permute.xlu0 %1031
    %v1033 = vlaneseq
    %v1034 = vshrl.u32 %v1033, 7
    %v1035 = vsub.s32 7, %v1034
    %v1036 = vrot.slane %v968, %v1035
    %1038 = vbcast.lane.b32.xlu0 %v1036, 256
    %v1039 = vpop.permute.xlu0 %1038
    %v1040 = vlaneseq
    %v1041 = vshrl.u32 %v1040, 7
    %v1042 = vsub.s32 0, %v1041
    %v1043 = vrot.slane %v969, %v1042
    %1045 = vbcast.lane.b32.xlu0 %v1043, 256
    %v1046 = vpop.permute.xlu0 %1045
    %v1047 = vlaneseq
    %v1048 = vshrl.u32 %v1047, 7
    %v1049 = vsub.s32 1, %v1048
    %v1050 = vrot.slane %v969, %v1049
    %1052 = vbcast.lane.b32.xlu0 %v1050, 256
    %v1053 = vpop.permute.xlu0 %1052
    %v1054 = vlaneseq
    %v1055 = vshrl.u32 %v1054, 7
    %v1056 = vsub.s32 2, %v1055
    %v1057 = vrot.slane %v969, %v1056
    %1059 = vbcast.lane.b32.xlu0 %v1057, 256
    %v1060 = vpop.permute.xlu0 %1059
    %v1061 = vlaneseq
    %v1062 = vshrl.u32 %v1061, 7
    %v1063 = vsub.s32 3, %v1062
    %v1064 = vrot.slane %v969, %v1063
    %1066 = vbcast.lane.b32.xlu0 %v1064, 256
    %v1067 = vpop.permute.xlu0 %1066
    %v1068 = vlaneseq
    %v1069 = vshrl.u32 %v1068, 7
    %v1070 = vsub.s32 4, %v1069
    %v1071 = vrot.slane %v969, %v1070
    %1073 = vbcast.lane.b32.xlu0 %v1071, 256
    %v1074 = vpop.permute.xlu0 %1073
    %v1075 = vlaneseq
    %v1076 = vshrl.u32 %v1075, 7
    %v1077 = vsub.s32 5, %v1076
    %v1078 = vrot.slane %v969, %v1077
    %1080 = vbcast.lane.b32.xlu0 %v1078, 256
    %v1081 = vpop.permute.xlu0 %1080
    %v1082 = vlaneseq
    %v1083 = vshrl.u32 %v1082, 7
    %v1084 = vsub.s32 6, %v1083
    %v1085 = vrot.slane %v969, %v1084
    %1087 = vbcast.lane.b32.xlu0 %v1085, 256
    %v1088 = vpop.permute.xlu0 %1087
    %v1089 = vlaneseq
    %v1090 = vshrl.u32 %v1089, 7
    %v1091 = vsub.s32 7, %v1090
    %v1092 = vrot.slane %v969, %v1091
    %1094 = vbcast.lane.b32.xlu0 %v1092, 256
    %v1095 = vpop.permute.xlu0 %1094
    %v1096 = vlaneseq
    %v1097 = vshrl.u32 %v1096, 7
    %v1098 = vsub.s32 0, %v1097
    %v1099 = vrot.slane %v970, %v1098
    %1101 = vbcast.lane.b32.xlu0 %v1099, 256
    %v1102 = vpop.permute.xlu0 %1101
    %v1103 = vlaneseq
    %v1104 = vshrl.u32 %v1103, 7
    %v1105 = vsub.s32 1, %v1104
    %v1106 = vrot.slane %v970, %v1105
    %1108 = vbcast.lane.b32.xlu0 %v1106, 256
    %v1109 = vpop.permute.xlu0 %1108
    %v1110 = vlaneseq
    %v1111 = vshrl.u32 %v1110, 7
    %v1112 = vsub.s32 2, %v1111
    %v1113 = vrot.slane %v970, %v1112
    %1115 = vbcast.lane.b32.xlu0 %v1113, 256
    %v1116 = vpop.permute.xlu0 %1115
    %v1117 = vlaneseq
    %v1118 = vshrl.u32 %v1117, 7
    %v1119 = vsub.s32 3, %v1118
    %v1120 = vrot.slane %v970, %v1119
    %1122 = vbcast.lane.b32.xlu0 %v1120, 256
    %v1123 = vpop.permute.xlu0 %1122
    %v1124 = vlaneseq
    %v1125 = vshrl.u32 %v1124, 7
    %v1126 = vsub.s32 4, %v1125
    %v1127 = vrot.slane %v970, %v1126
    %1129 = vbcast.lane.b32.xlu0 %v1127, 256
    %v1130 = vpop.permute.xlu0 %1129
    %v1131 = vlaneseq
    %v1132 = vshrl.u32 %v1131, 7
    %v1133 = vsub.s32 5, %v1132
    %v1134 = vrot.slane %v970, %v1133
    %1136 = vbcast.lane.b32.xlu0 %v1134, 256
    %v1137 = vpop.permute.xlu0 %1136
    %v1138 = vlaneseq
    %v1139 = vshrl.u32 %v1138, 7
    %v1140 = vsub.s32 6, %v1139
    %v1141 = vrot.slane %v970, %v1140
    %1143 = vbcast.lane.b32.xlu0 %v1141, 256
    %v1144 = vpop.permute.xlu0 %1143
    %v1145 = vlaneseq
    %v1146 = vshrl.u32 %v1145, 7
    %v1147 = vsub.s32 7, %v1146
    %v1148 = vrot.slane %v970, %v1147
    %1150 = vbcast.lane.b32.xlu0 %v1148, 256
    %v1151 = vpop.permute.xlu0 %1150
    %v1152 = vlaneseq
    %v1153 = vshrl.u32 %v1152, 7
    %v1154 = vsub.s32 0, %v1153
    %v1155 = vrot.slane %v971, %v1154
    %1157 = vbcast.lane.b32.xlu0 %v1155, 256
    %v1158 = vpop.permute.xlu0 %1157
    %v1159 = vlaneseq
    %v1160 = vshrl.u32 %v1159, 7
    %v1161 = vsub.s32 1, %v1160
    %v1162 = vrot.slane %v971, %v1161
    %1164 = vbcast.lane.b32.xlu0 %v1162, 256
    %v1165 = vpop.permute.xlu0 %1164
    %v1166 = vlaneseq
    %v1167 = vshrl.u32 %v1166, 7
    %v1168 = vsub.s32 2, %v1167
    %v1169 = vrot.slane %v971, %v1168
    %1171 = vbcast.lane.b32.xlu0 %v1169, 256
    %v1172 = vpop.permute.xlu0 %1171
    %v1173 = vlaneseq
    %v1174 = vshrl.u32 %v1173, 7
    %v1175 = vsub.s32 3, %v1174
    %v1176 = vrot.slane %v971, %v1175
    %1178 = vbcast.lane.b32.xlu0 %v1176, 256
    %v1179 = vpop.permute.xlu0 %1178
    %v1180 = vlaneseq
    %v1181 = vshrl.u32 %v1180, 7
    %v1182 = vsub.s32 4, %v1181
    %v1183 = vrot.slane %v971, %v1182
    %1185 = vbcast.lane.b32.xlu0 %v1183, 256
    %v1186 = vpop.permute.xlu0 %1185
    %v1187 = vlaneseq
    %v1188 = vshrl.u32 %v1187, 7
    %v1189 = vsub.s32 5, %v1188
    %v1190 = vrot.slane %v971, %v1189
    %1192 = vbcast.lane.b32.xlu0 %v1190, 256
    %v1193 = vpop.permute.xlu0 %1192
    %v1194 = vlaneseq
    %v1195 = vshrl.u32 %v1194, 7
    %v1196 = vsub.s32 6, %v1195
    %v1197 = vrot.slane %v971, %v1196
    %1199 = vbcast.lane.b32.xlu0 %v1197, 256
    %v1200 = vpop.permute.xlu0 %1199
    %v1201 = vlaneseq
    %v1202 = vshrl.u32 %v1201, 7
    %v1203 = vsub.s32 7, %v1202
    %v1204 = vrot.slane %v971, %v1203
    %1206 = vbcast.lane.b32.xlu0 %v1204, 256
    %v1207 = vpop.permute.xlu0 %1206
    %v1208 = vlaneseq
    %v1209 = vshrl.u32 %v1208, 7
    %v1210 = vsub.s32 0, %v1209
    %v1211 = vrot.slane %v972, %v1210
    %1213 = vbcast.lane.b32.xlu0 %v1211, 256
    %v1214 = vpop.permute.xlu0 %1213
    %v1215 = vlaneseq
    %v1216 = vshrl.u32 %v1215, 7
    %v1217 = vsub.s32 1, %v1216
    %v1218 = vrot.slane %v972, %v1217
    %1220 = vbcast.lane.b32.xlu0 %v1218, 256
    %v1221 = vpop.permute.xlu0 %1220
    %v1222 = vlaneseq
    %v1223 = vshrl.u32 %v1222, 7
    %v1224 = vsub.s32 2, %v1223
    %v1225 = vrot.slane %v972, %v1224
    %1227 = vbcast.lane.b32.xlu0 %v1225, 256
    %v1228 = vpop.permute.xlu0 %1227
    %v1229 = vlaneseq
    %v1230 = vshrl.u32 %v1229, 7
    %v1231 = vsub.s32 3, %v1230
    %v1232 = vrot.slane %v972, %v1231
    %1234 = vbcast.lane.b32.xlu0 %v1232, 256
    %v1235 = vpop.permute.xlu0 %1234
    %v1236 = vlaneseq
    %v1237 = vshrl.u32 %v1236, 7
    %v1238 = vsub.s32 4, %v1237
    %v1239 = vrot.slane %v972, %v1238
    %1241 = vbcast.lane.b32.xlu0 %v1239, 256
    %v1242 = vpop.permute.xlu0 %1241
    %v1243 = vlaneseq
    %v1244 = vshrl.u32 %v1243, 7
    %v1245 = vsub.s32 5, %v1244
    %v1246 = vrot.slane %v972, %v1245
    %1248 = vbcast.lane.b32.xlu0 %v1246, 256
    %v1249 = vpop.permute.xlu0 %1248
    %v1250 = vlaneseq
    %v1251 = vshrl.u32 %v1250, 7
    %v1252 = vsub.s32 6, %v1251
    %v1253 = vrot.slane %v972, %v1252
    %1255 = vbcast.lane.b32.xlu0 %v1253, 256
    %v1256 = vpop.permute.xlu0 %1255
    %v1257 = vlaneseq
    %v1258 = vshrl.u32 %v1257, 7
    %v1259 = vsub.s32 7, %v1258
    %v1260 = vrot.slane %v972, %v1259
    %1262 = vbcast.lane.b32.xlu0 %v1260, 256
    %v1263 = vpop.permute.xlu0 %1262
    %v1264 = vlaneseq
    %v1265 = vshrl.u32 %v1264, 7
    %v1266 = vsub.s32 0, %v1265
    %v1267 = vrot.slane %v973, %v1266
    %1269 = vbcast.lane.b32.xlu0 %v1267, 256
    %v1270 = vpop.permute.xlu0 %1269
    %v1271 = vlaneseq
    %v1272 = vshrl.u32 %v1271, 7
    %v1273 = vsub.s32 1, %v1272
    %v1274 = vrot.slane %v973, %v1273
    %1276 = vbcast.lane.b32.xlu0 %v1274, 256
    %v1277 = vpop.permute.xlu0 %1276
    %v1278 = vlaneseq
    %v1279 = vshrl.u32 %v1278, 7
    %v1280 = vsub.s32 2, %v1279
    %v1281 = vrot.slane %v973, %v1280
    %1283 = vbcast.lane.b32.xlu0 %v1281, 256
    %v1284 = vpop.permute.xlu0 %1283
    %v1285 = vlaneseq
    %v1286 = vshrl.u32 %v1285, 7
    %v1287 = vsub.s32 3, %v1286
    %v1288 = vrot.slane %v973, %v1287
    %1290 = vbcast.lane.b32.xlu0 %v1288, 256
    %v1291 = vpop.permute.xlu0 %1290
    %v1292 = vlaneseq
    %v1293 = vshrl.u32 %v1292, 7
    %v1294 = vsub.s32 4, %v1293
    %v1295 = vrot.slane %v973, %v1294
    %1297 = vbcast.lane.b32.xlu0 %v1295, 256
    %v1298 = vpop.permute.xlu0 %1297
    %v1299 = vlaneseq
    %v1300 = vshrl.u32 %v1299, 7
    %v1301 = vsub.s32 5, %v1300
    %v1302 = vrot.slane %v973, %v1301
    %1304 = vbcast.lane.b32.xlu0 %v1302, 256
    %v1305 = vpop.permute.xlu0 %1304
    %v1306 = vlaneseq
    %v1307 = vshrl.u32 %v1306, 7
    %v1308 = vsub.s32 6, %v1307
    %v1309 = vrot.slane %v973, %v1308
    %1311 = vbcast.lane.b32.xlu0 %v1309, 256
    %v1312 = vpop.permute.xlu0 %1311
    %v1313 = vlaneseq
    %v1314 = vshrl.u32 %v1313, 7
    %v1315 = vsub.s32 7, %v1314
    %v1316 = vrot.slane %v973, %v1315
    %1318 = vbcast.lane.b32.xlu0 %v1316, 256
    %v1319 = vpop.permute.xlu0 %1318
    %v1320 = vlaneseq
    %v1321 = vshrl.u32 %v1320, 7
    %v1322 = vsub.s32 0, %v1321
    %v1323 = vrot.slane %v974, %v1322
    %1325 = vbcast.lane.b32.xlu0 %v1323, 256
    %v1326 = vpop.permute.xlu0 %1325
    %v1327 = vlaneseq
    %v1328 = vshrl.u32 %v1327, 7
    %v1329 = vsub.s32 1, %v1328
    %v1330 = vrot.slane %v974, %v1329
    %1332 = vbcast.lane.b32.xlu0 %v1330, 256
    %v1333 = vpop.permute.xlu0 %1332
    %v1334 = vlaneseq
    %v1335 = vshrl.u32 %v1334, 7
    %v1336 = vsub.s32 2, %v1335
    %v1337 = vrot.slane %v974, %v1336
    %1339 = vbcast.lane.b32.xlu0 %v1337, 256
    %v1340 = vpop.permute.xlu0 %1339
    %v1341 = vlaneseq
    %v1342 = vshrl.u32 %v1341, 7
    %v1343 = vsub.s32 3, %v1342
    %v1344 = vrot.slane %v974, %v1343
    %1346 = vbcast.lane.b32.xlu0 %v1344, 256
    %v1347 = vpop.permute.xlu0 %1346
    %v1348 = vlaneseq
    %v1349 = vshrl.u32 %v1348, 7
    %v1350 = vsub.s32 4, %v1349
    %v1351 = vrot.slane %v974, %v1350
    %1353 = vbcast.lane.b32.xlu0 %v1351, 256
    %v1354 = vpop.permute.xlu0 %1353
    %v1355 = vlaneseq
    %v1356 = vshrl.u32 %v1355, 7
    %v1357 = vsub.s32 5, %v1356
    %v1358 = vrot.slane %v974, %v1357
    %1360 = vbcast.lane.b32.xlu0 %v1358, 256
    %v1361 = vpop.permute.xlu0 %1360
    %v1362 = vlaneseq
    %v1363 = vshrl.u32 %v1362, 7
    %v1364 = vsub.s32 6, %v1363
    %v1365 = vrot.slane %v974, %v1364
    %1367 = vbcast.lane.b32.xlu0 %v1365, 256
    %v1368 = vpop.permute.xlu0 %1367
    %v1369 = vlaneseq
    %v1370 = vshrl.u32 %v1369, 7
    %v1371 = vsub.s32 7, %v1370
    %v1372 = vrot.slane %v974, %v1371
    %1374 = vbcast.lane.b32.xlu0 %v1372, 256
    %v1375 = vpop.permute.xlu0 %1374
    %v1376 = vlaneseq
    %v1377 = vshrl.u32 %v1376, 7
    %v1378 = vsub.s32 0, %v1377
    %v1379 = vrot.slane %v975, %v1378
    %1381 = vbcast.lane.b32.xlu0 %v1379, 256
    %v1382 = vpop.permute.xlu0 %1381
    %v1383 = vlaneseq
    %v1384 = vshrl.u32 %v1383, 7
    %v1385 = vsub.s32 1, %v1384
    %v1386 = vrot.slane %v975, %v1385
    %1388 = vbcast.lane.b32.xlu0 %v1386, 256
    %v1389 = vpop.permute.xlu0 %1388
    %v1390 = vlaneseq
    %v1391 = vshrl.u32 %v1390, 7
    %v1392 = vsub.s32 2, %v1391
    %v1393 = vrot.slane %v975, %v1392
    %1395 = vbcast.lane.b32.xlu0 %v1393, 256
    %v1396 = vpop.permute.xlu0 %1395
    %v1397 = vlaneseq
    %v1398 = vshrl.u32 %v1397, 7
    %v1399 = vsub.s32 3, %v1398
    %v1400 = vrot.slane %v975, %v1399
    %1402 = vbcast.lane.b32.xlu0 %v1400, 256
    %v1403 = vpop.permute.xlu0 %1402
    %v1404 = vlaneseq
    %v1405 = vshrl.u32 %v1404, 7
    %v1406 = vsub.s32 4, %v1405
    %v1407 = vrot.slane %v975, %v1406
    %1409 = vbcast.lane.b32.xlu0 %v1407, 256
    %v1410 = vpop.permute.xlu0 %1409
    %v1411 = vlaneseq
    %v1412 = vshrl.u32 %v1411, 7
    %v1413 = vsub.s32 5, %v1412
    %v1414 = vrot.slane %v975, %v1413
    %1416 = vbcast.lane.b32.xlu0 %v1414, 256
    %v1417 = vpop.permute.xlu0 %1416
    %v1418 = vlaneseq
    %v1419 = vshrl.u32 %v1418, 7
    %v1420 = vsub.s32 6, %v1419
    %v1421 = vrot.slane %v975, %v1420
    %1423 = vbcast.lane.b32.xlu0 %v1421, 256
    %v1424 = vpop.permute.xlu0 %1423
    %v1425 = vlaneseq
    %v1426 = vshrl.u32 %v1425, 7
    %v1427 = vsub.s32 7, %v1426
    %v1428 = vrot.slane %v975, %v1427
    %1430 = vbcast.lane.b32.xlu0 %v1428, 256
    %v1431 = vpop.permute.xlu0 %1430
    %v1496 = vmul.f32 %v966, %v990
    %v1497 = vmul.f32 %v966, %v997
    %v1498 = vmul.f32 %v966, %v1004
    %v1499 = vmul.f32 %v966, %v1011
    %v1500 = vmul.f32 %v966, %v1018
    %v1501 = vmul.f32 %v966, %v1025
    %v1502 = vmul.f32 %v966, %v1032
    %v1503 = vmul.f32 %v966, %v1039
    %v1504 = vmul.f32 %v966, %v1046
    %v1505 = vmul.f32 %v966, %v1053
    %v1506 = vmul.f32 %v966, %v1060
    %v1507 = vmul.f32 %v966, %v1067
    %v1508 = vmul.f32 %v966, %v1074
    %v1509 = vmul.f32 %v966, %v1081
    %v1510 = vmul.f32 %v966, %v1088
    %v1511 = vmul.f32 %v966, %v1095
    %v1512 = vmul.f32 %v966, %v1102
    %v1513 = vmul.f32 %v966, %v1109
    %v1514 = vmul.f32 %v966, %v1116
    %v1515 = vmul.f32 %v966, %v1123
    %v1516 = vmul.f32 %v966, %v1130
    %v1517 = vmul.f32 %v966, %v1137
    %v1518 = vmul.f32 %v966, %v1144
    %v1519 = vmul.f32 %v966, %v1151
    %v1520 = vmul.f32 %v966, %v1158
    %v1521 = vmul.f32 %v966, %v1165
    %v1522 = vmul.f32 %v966, %v1172
    %v1523 = vmul.f32 %v966, %v1179
    %v1524 = vmul.f32 %v966, %v1186
    %v1525 = vmul.f32 %v966, %v1193
    %v1526 = vmul.f32 %v966, %v1200
    %v1527 = vmul.f32 %v966, %v1207
    %v1528 = vmul.f32 %v966, %v1214
    %v1529 = vmul.f32 %v966, %v1221
    %v1530 = vmul.f32 %v966, %v1228
    %v1531 = vmul.f32 %v966, %v1235
    %v1532 = vmul.f32 %v966, %v1242
    %v1533 = vmul.f32 %v966, %v1249
    %v1534 = vmul.f32 %v966, %v1256
    %v1535 = vmul.f32 %v966, %v1263
    %v1536 = vmul.f32 %v966, %v1270
    %v1537 = vmul.f32 %v966, %v1277
    %v1538 = vmul.f32 %v966, %v1284
    %v1539 = vmul.f32 %v966, %v1291
    %v1540 = vmul.f32 %v966, %v1298
    %v1541 = vmul.f32 %v966, %v1305
    %v1542 = vmul.f32 %v966, %v1312
    %v1543 = vmul.f32 %v966, %v1319
    %v1544 = vmul.f32 %v966, %v1326
    %v1545 = vmul.f32 %v966, %v1333
    %v1546 = vmul.f32 %v966, %v1340
    %v1547 = vmul.f32 %v966, %v1347
    %v1548 = vmul.f32 %v966, %v1354
    %v1549 = vmul.f32 %v966, %v1361
    %v1550 = vmul.f32 %v966, %v1368
    %v1551 = vmul.f32 %v966, %v1375
    %v1552 = vmul.f32 %v966, %v1382
    %v1553 = vmul.f32 %v966, %v1389
    %v1554 = vmul.f32 %v966, %v1396
    %v1555 = vmul.f32 %v966, %v1403
    %v1556 = vmul.f32 %v966, %v1410
    %v1557 = vmul.f32 %v966, %v1417
    %v1558 = vmul.f32 %v966, %v1424
    %v1559 = vmul.f32 %v966, %v1431
    %v1560 = vmul.f32 %v967, %v990
    %v1561 = vmul.f32 %v967, %v997
    %v1562 = vmul.f32 %v967, %v1004
    %v1563 = vmul.f32 %v967, %v1011
    %v1564 = vmul.f32 %v967, %v1018
    %v1565 = vmul.f32 %v967, %v1025
    %v1566 = vmul.f32 %v967, %v1032
    %v1567 = vmul.f32 %v967, %v1039
    %v1568 = vmul.f32 %v967, %v1046
    %v1569 = vmul.f32 %v967, %v1053
    %v1570 = vmul.f32 %v967, %v1060
    %v1571 = vmul.f32 %v967, %v1067
    %v1572 = vmul.f32 %v967, %v1074
    %v1573 = vmul.f32 %v967, %v1081
    %v1574 = vmul.f32 %v967, %v1088
    %v1575 = vmul.f32 %v967, %v1095
    %v1576 = vmul.f32 %v967, %v1102
    %v1577 = vmul.f32 %v967, %v1109
    %v1578 = vmul.f32 %v967, %v1116
    %v1579 = vmul.f32 %v967, %v1123
    %v1580 = vmul.f32 %v967, %v1130
    %v1581 = vmul.f32 %v967, %v1137
    %v1582 = vmul.f32 %v967, %v1144
    %v1583 = vmul.f32 %v967, %v1151
    %v1584 = vmul.f32 %v967, %v1158
    %v1585 = vmul.f32 %v967, %v1165
    %v1586 = vmul.f32 %v967, %v1172
    %v1587 = vmul.f32 %v967, %v1179
    %v1588 = vmul.f32 %v967, %v1186
    %v1589 = vmul.f32 %v967, %v1193
    %v1590 = vmul.f32 %v967, %v1200
    %v1591 = vmul.f32 %v967, %v1207
    %v1592 = vmul.f32 %v967, %v1214
    %v1593 = vmul.f32 %v967, %v1221
    %v1594 = vmul.f32 %v967, %v1228
    %v1595 = vmul.f32 %v967, %v1235
    %v1596 = vmul.f32 %v967, %v1242
    %v1597 = vmul.f32 %v967, %v1249
    %v1598 = vmul.f32 %v967, %v1256
    %v1599 = vmul.f32 %v967, %v1263
    %v1600 = vmul.f32 %v967, %v1270
    %v1601 = vmul.f32 %v967, %v1277
    %v1602 = vmul.f32 %v967, %v1284
    %v1603 = vmul.f32 %v967, %v1291
    %v1604 = vmul.f32 %v967, %v1298
    %v1605 = vmul.f32 %v967, %v1305
    %v1606 = vmul.f32 %v967, %v1312
    %v1607 = vmul.f32 %v967, %v1319
    %v1608 = vmul.f32 %v967, %v1326
    %v1609 = vmul.f32 %v967, %v1333
    %v1610 = vmul.f32 %v967, %v1340
    %v1611 = vmul.f32 %v967, %v1347
    %v1612 = vmul.f32 %v967, %v1354
    %v1613 = vmul.f32 %v967, %v1361
    %v1614 = vmul.f32 %v967, %v1368
    %v1615 = vmul.f32 %v967, %v1375
    %v1616 = vmul.f32 %v967, %v1382
    %v1617 = vmul.f32 %v967, %v1389
    %v1618 = vmul.f32 %v967, %v1396
    %v1619 = vmul.f32 %v967, %v1403
    %v1620 = vmul.f32 %v967, %v1410
    %v1621 = vmul.f32 %v967, %v1417
    %v1622 = vmul.f32 %v967, %v1424
    %v1623 = vmul.f32 %v967, %v1431
    %1752 = vset.pattern.permute.xlu0 0
    %1753 = vperm.xlu0 %1752, %v1496
    %v1754 = vpop.permute.xlu0 %1753
    %1755 = vset.pattern.permute.xlu0 0
    %1756 = vperm.xlu0 %1755, %v1497
    %v1757 = vpop.permute.xlu0 %1756
    %1758 = vset.pattern.permute.xlu0 0
    %1759 = vperm.xlu0 %1758, %v1498
    %v1760 = vpop.permute.xlu0 %1759
    %1761 = vset.pattern.permute.xlu0 0
    %1762 = vperm.xlu0 %1761, %v1499
    %v1763 = vpop.permute.xlu0 %1762
    %1764 = vset.pattern.permute.xlu0 0
    %1765 = vperm.xlu0 %1764, %v1500
    %v1766 = vpop.permute.xlu0 %1765
    %1767 = vset.pattern.permute.xlu0 0
    %1768 = vperm.xlu0 %1767, %v1501
    %v1769 = vpop.permute.xlu0 %1768
    %1770 = vset.pattern.permute.xlu0 0
    %1771 = vperm.xlu0 %1770, %v1502
    %v1772 = vpop.permute.xlu0 %1771
    %1773 = vset.pattern.permute.xlu0 0
    %1774 = vperm.xlu0 %1773, %v1503
    %v1775 = vpop.permute.xlu0 %1774
    %1776 = vset.pattern.permute.xlu0 0
    %1777 = vperm.xlu0 %1776, %v1504
    %v1778 = vpop.permute.xlu0 %1777
    %1779 = vset.pattern.permute.xlu0 0
    %1780 = vperm.xlu0 %1779, %v1505
    %v1781 = vpop.permute.xlu0 %1780
    %1782 = vset.pattern.permute.xlu0 0
    %1783 = vperm.xlu0 %1782, %v1506
    %v1784 = vpop.permute.xlu0 %1783
    %1785 = vset.pattern.permute.xlu0 0
    %1786 = vperm.xlu0 %1785, %v1507
    %v1787 = vpop.permute.xlu0 %1786
    %1788 = vset.pattern.permute.xlu0 0
    %1789 = vperm.xlu0 %1788, %v1508
    %v1790 = vpop.permute.xlu0 %1789
    %1791 = vset.pattern.permute.xlu0 0
    %1792 = vperm.xlu0 %1791, %v1509
    %v1793 = vpop.permute.xlu0 %1792
    %1794 = vset.pattern.permute.xlu0 0
    %1795 = vperm.xlu0 %1794, %v1510
    %v1796 = vpop.permute.xlu0 %1795
    %1797 = vset.pattern.permute.xlu0 0
    %1798 = vperm.xlu0 %1797, %v1511
    %v1799 = vpop.permute.xlu0 %1798
    %1800 = vset.pattern.permute.xlu0 0
    %1801 = vperm.xlu0 %1800, %v1512
    %v1802 = vpop.permute.xlu0 %1801
    %1803 = vset.pattern.permute.xlu0 0
    %1804 = vperm.xlu0 %1803, %v1513
    %v1805 = vpop.permute.xlu0 %1804
    %1806 = vset.pattern.permute.xlu0 0
    %1807 = vperm.xlu0 %1806, %v1514
    %v1808 = vpop.permute.xlu0 %1807
    %1809 = vset.pattern.permute.xlu0 0
    %1810 = vperm.xlu0 %1809, %v1515
    %v1811 = vpop.permute.xlu0 %1810
    %1812 = vset.pattern.permute.xlu0 0
    %1813 = vperm.xlu0 %1812, %v1516
    %v1814 = vpop.permute.xlu0 %1813
    %1815 = vset.pattern.permute.xlu0 0
    %1816 = vperm.xlu0 %1815, %v1517
    %v1817 = vpop.permute.xlu0 %1816
    %1818 = vset.pattern.permute.xlu0 0
    %1819 = vperm.xlu0 %1818, %v1518
    %v1820 = vpop.permute.xlu0 %1819
    %1821 = vset.pattern.permute.xlu0 0
    %1822 = vperm.xlu0 %1821, %v1519
    %v1823 = vpop.permute.xlu0 %1822
    %1824 = vset.pattern.permute.xlu0 0
    %1825 = vperm.xlu0 %1824, %v1520
    %v1826 = vpop.permute.xlu0 %1825
    %1827 = vset.pattern.permute.xlu0 0
    %1828 = vperm.xlu0 %1827, %v1521
    %v1829 = vpop.permute.xlu0 %1828
    %1830 = vset.pattern.permute.xlu0 0
    %1831 = vperm.xlu0 %1830, %v1522
    %v1832 = vpop.permute.xlu0 %1831
    %1833 = vset.pattern.permute.xlu0 0
    %1834 = vperm.xlu0 %1833, %v1523
    %v1835 = vpop.permute.xlu0 %1834
    %1836 = vset.pattern.permute.xlu0 0
    %1837 = vperm.xlu0 %1836, %v1524
    %v1838 = vpop.permute.xlu0 %1837
    %1839 = vset.pattern.permute.xlu0 0
    %1840 = vperm.xlu0 %1839, %v1525
    %v1841 = vpop.permute.xlu0 %1840
    %1842 = vset.pattern.permute.xlu0 0
    %1843 = vperm.xlu0 %1842, %v1526
    %v1844 = vpop.permute.xlu0 %1843
    %1845 = vset.pattern.permute.xlu0 0
    %1846 = vperm.xlu0 %1845, %v1527
    %v1847 = vpop.permute.xlu0 %1846
    %1848 = vset.pattern.permute.xlu0 0
    %1849 = vperm.xlu0 %1848, %v1528
    %v1850 = vpop.permute.xlu0 %1849
    %1851 = vset.pattern.permute.xlu0 0
    %1852 = vperm.xlu0 %1851, %v1529
    %v1853 = vpop.permute.xlu0 %1852
    %1854 = vset.pattern.permute.xlu0 0
    %1855 = vperm.xlu0 %1854, %v1530
    %v1856 = vpop.permute.xlu0 %1855
    %1857 = vset.pattern.permute.xlu0 0
    %1858 = vperm.xlu0 %1857, %v1531
    %v1859 = vpop.permute.xlu0 %1858
    %1860 = vset.pattern.permute.xlu0 0
    %1861 = vperm.xlu0 %1860, %v1532
    %v1862 = vpop.permute.xlu0 %1861
    %1863 = vset.pattern.permute.xlu0 0
    %1864 = vperm.xlu0 %1863, %v1533
    %v1865 = vpop.permute.xlu0 %1864
    %1866 = vset.pattern.permute.xlu0 0
    %1867 = vperm.xlu0 %1866, %v1534
    %v1868 = vpop.permute.xlu0 %1867
    %1869 = vset.pattern.permute.xlu0 0
    %1870 = vperm.xlu0 %1869, %v1535
    %v1871 = vpop.permute.xlu0 %1870
    %1872 = vset.pattern.permute.xlu0 0
    %1873 = vperm.xlu0 %1872, %v1536
    %v1874 = vpop.permute.xlu0 %1873
    %1875 = vset.pattern.permute.xlu0 0
    %1876 = vperm.xlu0 %1875, %v1537
    %v1877 = vpop.permute.xlu0 %1876
    %1878 = vset.pattern.permute.xlu0 0
    %1879 = vperm.xlu0 %1878, %v1538
    %v1880 = vpop.permute.xlu0 %1879
    %1881 = vset.pattern.permute.xlu0 0
    %1882 = vperm.xlu0 %1881, %v1539
    %v1883 = vpop.permute.xlu0 %1882
    %1884 = vset.pattern.permute.xlu0 0
    %1885 = vperm.xlu0 %1884, %v1540
    %v1886 = vpop.permute.xlu0 %1885
    %1887 = vset.pattern.permute.xlu0 0
    %1888 = vperm.xlu0 %1887, %v1541
    %v1889 = vpop.permute.xlu0 %1888
    %1890 = vset.pattern.permute.xlu0 0
    %1891 = vperm.xlu0 %1890, %v1542
    %v1892 = vpop.permute.xlu0 %1891
    %1893 = vset.pattern.permute.xlu0 0
    %1894 = vperm.xlu0 %1893, %v1543
    %v1895 = vpop.permute.xlu0 %1894
    %1896 = vset.pattern.permute.xlu0 0
    %1897 = vperm.xlu0 %1896, %v1544
    %v1898 = vpop.permute.xlu0 %1897
    %1899 = vset.pattern.permute.xlu0 0
    %1900 = vperm.xlu0 %1899, %v1545
    %v1901 = vpop.permute.xlu0 %1900
    %1902 = vset.pattern.permute.xlu0 0
    %1903 = vperm.xlu0 %1902, %v1546
    %v1904 = vpop.permute.xlu0 %1903
    %1905 = vset.pattern.permute.xlu0 0
    %1906 = vperm.xlu0 %1905, %v1547
    %v1907 = vpop.permute.xlu0 %1906
    %1908 = vset.pattern.permute.xlu0 0
    %1909 = vperm.xlu0 %1908, %v1548
    %v1910 = vpop.permute.xlu0 %1909
    %1911 = vset.pattern.permute.xlu0 0
    %1912 = vperm.xlu0 %1911, %v1549
    %v1913 = vpop.permute.xlu0 %1912
    %1914 = vset.pattern.permute.xlu0 0
    %1915 = vperm.xlu0 %1914, %v1550
    %v1916 = vpop.permute.xlu0 %1915
    %1917 = vset.pattern.permute.xlu0 0
    %1918 = vperm.xlu0 %1917, %v1551
    %v1919 = vpop.permute.xlu0 %1918
    %1920 = vset.pattern.permute.xlu0 0
    %1921 = vperm.xlu0 %1920, %v1552
    %v1922 = vpop.permute.xlu0 %1921
    %1923 = vset.pattern.permute.xlu0 0
    %1924 = vperm.xlu0 %1923, %v1553
    %v1925 = vpop.permute.xlu0 %1924
    %1926 = vset.pattern.permute.xlu0 0
    %1927 = vperm.xlu0 %1926, %v1554
    %v1928 = vpop.permute.xlu0 %1927
    %1929 = vset.pattern.permute.xlu0 0
    %1930 = vperm.xlu0 %1929, %v1555
    %v1931 = vpop.permute.xlu0 %1930
    %1932 = vset.pattern.permute.xlu0 0
    %1933 = vperm.xlu0 %1932, %v1556
    %v1934 = vpop.permute.xlu0 %1933
    %1935 = vset.pattern.permute.xlu0 0
    %1936 = vperm.xlu0 %1935, %v1557
    %v1937 = vpop.permute.xlu0 %1936
    %1938 = vset.pattern.permute.xlu0 0
    %1939 = vperm.xlu0 %1938, %v1558
    %v1940 = vpop.permute.xlu0 %1939
    %1941 = vset.pattern.permute.xlu0 0
    %1942 = vperm.xlu0 %1941, %v1559
    %v1943 = vpop.permute.xlu0 %1942
    %1944 = vset.pattern.permute.xlu0 0
    %1945 = vperm.xlu0 %1944, %v1560
    %v1946 = vpop.permute.xlu0 %1945
    %1947 = vset.pattern.permute.xlu0 0
    %1948 = vperm.xlu0 %1947, %v1561
    %v1949 = vpop.permute.xlu0 %1948
    %1950 = vset.pattern.permute.xlu0 0
    %1951 = vperm.xlu0 %1950, %v1562
    %v1952 = vpop.permute.xlu0 %1951
    %1953 = vset.pattern.permute.xlu0 0
    %1954 = vperm.xlu0 %1953, %v1563
    %v1955 = vpop.permute.xlu0 %1954
    %1956 = vset.pattern.permute.xlu0 0
    %1957 = vperm.xlu0 %1956, %v1564
    %v1958 = vpop.permute.xlu0 %1957
    %1959 = vset.pattern.permute.xlu0 0
    %1960 = vperm.xlu0 %1959, %v1565
    %v1961 = vpop.permute.xlu0 %1960
    %1962 = vset.pattern.permute.xlu0 0
    %1963 = vperm.xlu0 %1962, %v1566
    %v1964 = vpop.permute.xlu0 %1963
    %1965 = vset.pattern.permute.xlu0 0
    %1966 = vperm.xlu0 %1965, %v1567
    %v1967 = vpop.permute.xlu0 %1966
    %1968 = vset.pattern.permute.xlu0 0
    %1969 = vperm.xlu0 %1968, %v1568
    %v1970 = vpop.permute.xlu0 %1969
    %1971 = vset.pattern.permute.xlu0 0
    %1972 = vperm.xlu0 %1971, %v1569
    %v1973 = vpop.permute.xlu0 %1972
    %1974 = vset.pattern.permute.xlu0 0
    %1975 = vperm.xlu0 %1974, %v1570
    %v1976 = vpop.permute.xlu0 %1975
    %1977 = vset.pattern.permute.xlu0 0
    %1978 = vperm.xlu0 %1977, %v1571
    %v1979 = vpop.permute.xlu0 %1978
    %1980 = vset.pattern.permute.xlu0 0
    %1981 = vperm.xlu0 %1980, %v1572
    %v1982 = vpop.permute.xlu0 %1981
    %1983 = vset.pattern.permute.xlu0 0
    %1984 = vperm.xlu0 %1983, %v1573
    %v1985 = vpop.permute.xlu0 %1984
    %1986 = vset.pattern.permute.xlu0 0
    %1987 = vperm.xlu0 %1986, %v1574
    %v1988 = vpop.permute.xlu0 %1987
    %1989 = vset.pattern.permute.xlu0 0
    %1990 = vperm.xlu0 %1989, %v1575
    %v1991 = vpop.permute.xlu0 %1990
    %1992 = vset.pattern.permute.xlu0 0
    %1993 = vperm.xlu0 %1992, %v1576
    %v1994 = vpop.permute.xlu0 %1993
    %1995 = vset.pattern.permute.xlu0 0
    %1996 = vperm.xlu0 %1995, %v1577
    %v1997 = vpop.permute.xlu0 %1996
    %1998 = vset.pattern.permute.xlu0 0
    %1999 = vperm.xlu0 %1998, %v1578
    %v2000 = vpop.permute.xlu0 %1999
    %2001 = vset.pattern.permute.xlu0 0
    %2002 = vperm.xlu0 %2001, %v1579
    %v2003 = vpop.permute.xlu0 %2002
    %2004 = vset.pattern.permute.xlu0 0
    %2005 = vperm.xlu0 %2004, %v1580
    %v2006 = vpop.permute.xlu0 %2005
    %2007 = vset.pattern.permute.xlu0 0
    %2008 = vperm.xlu0 %2007, %v1581
    %v2009 = vpop.permute.xlu0 %2008
    %2010 = vset.pattern.permute.xlu0 0
    %2011 = vperm.xlu0 %2010, %v1582
    %v2012 = vpop.permute.xlu0 %2011
    %2013 = vset.pattern.permute.xlu0 0
    %2014 = vperm.xlu0 %2013, %v1583
    %v2015 = vpop.permute.xlu0 %2014
    %2016 = vset.pattern.permute.xlu0 0
    %2017 = vperm.xlu0 %2016, %v1584
    %v2018 = vpop.permute.xlu0 %2017
    %2019 = vset.pattern.permute.xlu0 0
    %2020 = vperm.xlu0 %2019, %v1585
    %v2021 = vpop.permute.xlu0 %2020
    %2022 = vset.pattern.permute.xlu0 0
    %2023 = vperm.xlu0 %2022, %v1586
    %v2024 = vpop.permute.xlu0 %2023
    %2025 = vset.pattern.permute.xlu0 0
    %2026 = vperm.xlu0 %2025, %v1587
    %v2027 = vpop.permute.xlu0 %2026
    %2028 = vset.pattern.permute.xlu0 0
    %2029 = vperm.xlu0 %2028, %v1588
    %v2030 = vpop.permute.xlu0 %2029
    %2031 = vset.pattern.permute.xlu0 0
    %2032 = vperm.xlu0 %2031, %v1589
    %v2033 = vpop.permute.xlu0 %2032
    %2034 = vset.pattern.permute.xlu0 0
    %2035 = vperm.xlu0 %2034, %v1590
    %v2036 = vpop.permute.xlu0 %2035
    %2037 = vset.pattern.permute.xlu0 0
    %2038 = vperm.xlu0 %2037, %v1591
    %v2039 = vpop.permute.xlu0 %2038
    %2040 = vset.pattern.permute.xlu0 0
    %2041 = vperm.xlu0 %2040, %v1592
    %v2042 = vpop.permute.xlu0 %2041
    %2043 = vset.pattern.permute.xlu0 0
    %2044 = vperm.xlu0 %2043, %v1593
    %v2045 = vpop.permute.xlu0 %2044
    %2046 = vset.pattern.permute.xlu0 0
    %2047 = vperm.xlu0 %2046, %v1594
    %v2048 = vpop.permute.xlu0 %2047
    %2049 = vset.pattern.permute.xlu0 0
    %2050 = vperm.xlu0 %2049, %v1595
    %v2051 = vpop.permute.xlu0 %2050
    %2052 = vset.pattern.permute.xlu0 0
    %2053 = vperm.xlu0 %2052, %v1596
    %v2054 = vpop.permute.xlu0 %2053
    %2055 = vset.pattern.permute.xlu0 0
    %2056 = vperm.xlu0 %2055, %v1597
    %v2057 = vpop.permute.xlu0 %2056
    %2058 = vset.pattern.permute.xlu0 0
    %2059 = vperm.xlu0 %2058, %v1598
    %v2060 = vpop.permute.xlu0 %2059
    %2061 = vset.pattern.permute.xlu0 0
    %2062 = vperm.xlu0 %2061, %v1599
    %v2063 = vpop.permute.xlu0 %2062
    %2064 = vset.pattern.permute.xlu0 0
    %2065 = vperm.xlu0 %2064, %v1600
    %v2066 = vpop.permute.xlu0 %2065
    %2067 = vset.pattern.permute.xlu0 0
    %2068 = vperm.xlu0 %2067, %v1601
    %v2069 = vpop.permute.xlu0 %2068
    %2070 = vset.pattern.permute.xlu0 0
    %2071 = vperm.xlu0 %2070, %v1602
    %v2072 = vpop.permute.xlu0 %2071
    %2073 = vset.pattern.permute.xlu0 0
    %2074 = vperm.xlu0 %2073, %v1603
    %v2075 = vpop.permute.xlu0 %2074
    %2076 = vset.pattern.permute.xlu0 0
    %2077 = vperm.xlu0 %2076, %v1604
    %v2078 = vpop.permute.xlu0 %2077
    %2079 = vset.pattern.permute.xlu0 0
    %2080 = vperm.xlu0 %2079, %v1605
    %v2081 = vpop.permute.xlu0 %2080
    %2082 = vset.pattern.permute.xlu0 0
    %2083 = vperm.xlu0 %2082, %v1606
    %v2084 = vpop.permute.xlu0 %2083
    %2085 = vset.pattern.permute.xlu0 0
    %2086 = vperm.xlu0 %2085, %v1607
    %v2087 = vpop.permute.xlu0 %2086
    %2088 = vset.pattern.permute.xlu0 0
    %2089 = vperm.xlu0 %2088, %v1608
    %v2090 = vpop.permute.xlu0 %2089
    %2091 = vset.pattern.permute.xlu0 0
    %2092 = vperm.xlu0 %2091, %v1609
    %v2093 = vpop.permute.xlu0 %2092
    %2094 = vset.pattern.permute.xlu0 0
    %2095 = vperm.xlu0 %2094, %v1610
    %v2096 = vpop.permute.xlu0 %2095
    %2097 = vset.pattern.permute.xlu0 0
    %2098 = vperm.xlu0 %2097, %v1611
    %v2099 = vpop.permute.xlu0 %2098
    %2100 = vset.pattern.permute.xlu0 0
    %2101 = vperm.xlu0 %2100, %v1612
    %v2102 = vpop.permute.xlu0 %2101
    %2103 = vset.pattern.permute.xlu0 0
    %2104 = vperm.xlu0 %2103, %v1613
    %v2105 = vpop.permute.xlu0 %2104
    %2106 = vset.pattern.permute.xlu0 0
    %2107 = vperm.xlu0 %2106, %v1614
    %v2108 = vpop.permute.xlu0 %2107
    %2109 = vset.pattern.permute.xlu0 0
    %2110 = vperm.xlu0 %2109, %v1615
    %v2111 = vpop.permute.xlu0 %2110
    %2112 = vset.pattern.permute.xlu0 0
    %2113 = vperm.xlu0 %2112, %v1616
    %v2114 = vpop.permute.xlu0 %2113
    %2115 = vset.pattern.permute.xlu0 0
    %2116 = vperm.xlu0 %2115, %v1617
    %v2117 = vpop.permute.xlu0 %2116
    %2118 = vset.pattern.permute.xlu0 0
    %2119 = vperm.xlu0 %2118, %v1618
    %v2120 = vpop.permute.xlu0 %2119
    %2121 = vset.pattern.permute.xlu0 0
    %2122 = vperm.xlu0 %2121, %v1619
    %v2123 = vpop.permute.xlu0 %2122
    %2124 = vset.pattern.permute.xlu0 0
    %2125 = vperm.xlu0 %2124, %v1620
    %v2126 = vpop.permute.xlu0 %2125
    %2127 = vset.pattern.permute.xlu0 0
    %2128 = vperm.xlu0 %2127, %v1621
    %v2129 = vpop.permute.xlu0 %2128
    %2130 = vset.pattern.permute.xlu0 0
    %2131 = vperm.xlu0 %2130, %v1622
    %v2132 = vpop.permute.xlu0 %2131
    %2133 = vset.pattern.permute.xlu0 0
    %2134 = vperm.xlu0 %2133, %v1623
    %v2135 = vpop.permute.xlu0 %2134
    %v2136 = vlaneseq
    %v2137 = vshrl.u32 %v2136, 7
    %v2138 = vsub.s32 %v621, %v2137
    %v2139 = vrot.slane %v1754, %v2138
    %v2140 = vlaneseq
    %v2141 = vshrl.u32 %v2140, 7
    %v2142 = vsub.s32 %v621, %v2141
    %v2143 = vrot.slane %v1757, %v2142
    %v2144 = vlaneseq
    %v2145 = vshrl.u32 %v2144, 7
    %v2146 = vsub.s32 %v621, %v2145
    %v2147 = vrot.slane %v1760, %v2146
    %v2148 = vlaneseq
    %v2149 = vshrl.u32 %v2148, 7
    %v2150 = vsub.s32 %v621, %v2149
    %v2151 = vrot.slane %v1763, %v2150
    %v2152 = vlaneseq
    %v2153 = vshrl.u32 %v2152, 7
    %v2154 = vsub.s32 %v621, %v2153
    %v2155 = vrot.slane %v1766, %v2154
    %v2156 = vlaneseq
    %v2157 = vshrl.u32 %v2156, 7
    %v2158 = vsub.s32 %v621, %v2157
    %v2159 = vrot.slane %v1769, %v2158
    %v2160 = vlaneseq
    %v2161 = vshrl.u32 %v2160, 7
    %v2162 = vsub.s32 %v621, %v2161
    %v2163 = vrot.slane %v1772, %v2162
    %v2164 = vlaneseq
    %v2165 = vshrl.u32 %v2164, 7
    %v2166 = vsub.s32 %v621, %v2165
    %v2167 = vrot.slane %v1775, %v2166
    %v2168 = vlaneseq
    %v2169 = vshrl.u32 %v2168, 7
    %v2170 = vsub.s32 %v621, %v2169
    %v2171 = vrot.slane %v1778, %v2170
    %v2172 = vlaneseq
    %v2173 = vshrl.u32 %v2172, 7
    %v2174 = vsub.s32 %v621, %v2173
    %v2175 = vrot.slane %v1781, %v2174
    %v2176 = vlaneseq
    %v2177 = vshrl.u32 %v2176, 7
    %v2178 = vsub.s32 %v621, %v2177
    %v2179 = vrot.slane %v1784, %v2178
    %v2180 = vlaneseq
    %v2181 = vshrl.u32 %v2180, 7
    %v2182 = vsub.s32 %v621, %v2181
    %v2183 = vrot.slane %v1787, %v2182
    %v2184 = vlaneseq
    %v2185 = vshrl.u32 %v2184, 7
    %v2186 = vsub.s32 %v621, %v2185
    %v2187 = vrot.slane %v1790, %v2186
    %v2188 = vlaneseq
    %v2189 = vshrl.u32 %v2188, 7
    %v2190 = vsub.s32 %v621, %v2189
    %v2191 = vrot.slane %v1793, %v2190
    %v2192 = vlaneseq
    %v2193 = vshrl.u32 %v2192, 7
    %v2194 = vsub.s32 %v621, %v2193
    %v2195 = vrot.slane %v1796, %v2194
    %v2196 = vlaneseq
    %v2197 = vshrl.u32 %v2196, 7
    %v2198 = vsub.s32 %v621, %v2197
    %v2199 = vrot.slane %v1799, %v2198
    %v2200 = vlaneseq
    %v2201 = vshrl.u32 %v2200, 7
    %v2202 = vsub.s32 %v621, %v2201
    %v2203 = vrot.slane %v1802, %v2202
    %v2204 = vlaneseq
    %v2205 = vshrl.u32 %v2204, 7
    %v2206 = vsub.s32 %v621, %v2205
    %v2207 = vrot.slane %v1805, %v2206
    %v2208 = vlaneseq
    %v2209 = vshrl.u32 %v2208, 7
    %v2210 = vsub.s32 %v621, %v2209
    %v2211 = vrot.slane %v1808, %v2210
    %v2212 = vlaneseq
    %v2213 = vshrl.u32 %v2212, 7
    %v2214 = vsub.s32 %v621, %v2213
    %v2215 = vrot.slane %v1811, %v2214
    %v2216 = vlaneseq
    %v2217 = vshrl.u32 %v2216, 7
    %v2218 = vsub.s32 %v621, %v2217
    %v2219 = vrot.slane %v1814, %v2218
    %v2220 = vlaneseq
    %v2221 = vshrl.u32 %v2220, 7
    %v2222 = vsub.s32 %v621, %v2221
    %v2223 = vrot.slane %v1817, %v2222
    %v2224 = vlaneseq
    %v2225 = vshrl.u32 %v2224, 7
    %v2226 = vsub.s32 %v621, %v2225
    %v2227 = vrot.slane %v1820, %v2226
    %v2228 = vlaneseq
    %v2229 = vshrl.u32 %v2228, 7
    %v2230 = vsub.s32 %v621, %v2229
    %v2231 = vrot.slane %v1823, %v2230
    %v2232 = vlaneseq
    %v2233 = vshrl.u32 %v2232, 7
    %v2234 = vsub.s32 %v621, %v2233
    %v2235 = vrot.slane %v1826, %v2234
    %v2236 = vlaneseq
    %v2237 = vshrl.u32 %v2236, 7
    %v2238 = vsub.s32 %v621, %v2237
    %v2239 = vrot.slane %v1829, %v2238
    %v2240 = vlaneseq
    %v2241 = vshrl.u32 %v2240, 7
    %v2242 = vsub.s32 %v621, %v2241
    %v2243 = vrot.slane %v1832, %v2242
    %v2244 = vlaneseq
    %v2245 = vshrl.u32 %v2244, 7
    %v2246 = vsub.s32 %v621, %v2245
    %v2247 = vrot.slane %v1835, %v2246
    %v2248 = vlaneseq
    %v2249 = vshrl.u32 %v2248, 7
    %v2250 = vsub.s32 %v621, %v2249
    %v2251 = vrot.slane %v1838, %v2250
    %v2252 = vlaneseq
    %v2253 = vshrl.u32 %v2252, 7
    %v2254 = vsub.s32 %v621, %v2253
    %v2255 = vrot.slane %v1841, %v2254
    %v2256 = vlaneseq
    %v2257 = vshrl.u32 %v2256, 7
    %v2258 = vsub.s32 %v621, %v2257
    %v2259 = vrot.slane %v1844, %v2258
    %v2260 = vlaneseq
    %v2261 = vshrl.u32 %v2260, 7
    %v2262 = vsub.s32 %v621, %v2261
    %v2263 = vrot.slane %v1847, %v2262
    %v2264 = vlaneseq
    %v2265 = vshrl.u32 %v2264, 7
    %v2266 = vsub.s32 %v621, %v2265
    %v2267 = vrot.slane %v1850, %v2266
    %v2268 = vlaneseq
    %v2269 = vshrl.u32 %v2268, 7
    %v2270 = vsub.s32 %v621, %v2269
    %v2271 = vrot.slane %v1853, %v2270
    %v2272 = vlaneseq
    %v2273 = vshrl.u32 %v2272, 7
    %v2274 = vsub.s32 %v621, %v2273
    %v2275 = vrot.slane %v1856, %v2274
    %v2276 = vlaneseq
    %v2277 = vshrl.u32 %v2276, 7
    %v2278 = vsub.s32 %v621, %v2277
    %v2279 = vrot.slane %v1859, %v2278
    %v2280 = vlaneseq
    %v2281 = vshrl.u32 %v2280, 7
    %v2282 = vsub.s32 %v621, %v2281
    %v2283 = vrot.slane %v1862, %v2282
    %v2284 = vlaneseq
    %v2285 = vshrl.u32 %v2284, 7
    %v2286 = vsub.s32 %v621, %v2285
    %v2287 = vrot.slane %v1865, %v2286
    %v2288 = vlaneseq
    %v2289 = vshrl.u32 %v2288, 7
    %v2290 = vsub.s32 %v621, %v2289
    %v2291 = vrot.slane %v1868, %v2290
    %v2292 = vlaneseq
    %v2293 = vshrl.u32 %v2292, 7
    %v2294 = vsub.s32 %v621, %v2293
    %v2295 = vrot.slane %v1871, %v2294
    %v2296 = vlaneseq
    %v2297 = vshrl.u32 %v2296, 7
    %v2298 = vsub.s32 %v621, %v2297
    %v2299 = vrot.slane %v1874, %v2298
    %v2300 = vlaneseq
    %v2301 = vshrl.u32 %v2300, 7
    %v2302 = vsub.s32 %v621, %v2301
    %v2303 = vrot.slane %v1877, %v2302
    %v2304 = vlaneseq
    %v2305 = vshrl.u32 %v2304, 7
    %v2306 = vsub.s32 %v621, %v2305
    %v2307 = vrot.slane %v1880, %v2306
    %v2308 = vlaneseq
    %v2309 = vshrl.u32 %v2308, 7
    %v2310 = vsub.s32 %v621, %v2309
    %v2311 = vrot.slane %v1883, %v2310
    %v2312 = vlaneseq
    %v2313 = vshrl.u32 %v2312, 7
    %v2314 = vsub.s32 %v621, %v2313
    %v2315 = vrot.slane %v1886, %v2314
    %v2316 = vlaneseq
    %v2317 = vshrl.u32 %v2316, 7
    %v2318 = vsub.s32 %v621, %v2317
    %v2319 = vrot.slane %v1889, %v2318
    %v2320 = vlaneseq
    %v2321 = vshrl.u32 %v2320, 7
    %v2322 = vsub.s32 %v621, %v2321
    %v2323 = vrot.slane %v1892, %v2322
    %v2324 = vlaneseq
    %v2325 = vshrl.u32 %v2324, 7
    %v2326 = vsub.s32 %v621, %v2325
    %v2327 = vrot.slane %v1895, %v2326
    %v2328 = vlaneseq
    %v2329 = vshrl.u32 %v2328, 7
    %v2330 = vsub.s32 %v621, %v2329
    %v2331 = vrot.slane %v1898, %v2330
    %v2332 = vlaneseq
    %v2333 = vshrl.u32 %v2332, 7
    %v2334 = vsub.s32 %v621, %v2333
    %v2335 = vrot.slane %v1901, %v2334
    %v2336 = vlaneseq
    %v2337 = vshrl.u32 %v2336, 7
    %v2338 = vsub.s32 %v621, %v2337
    %v2339 = vrot.slane %v1904, %v2338
    %v2340 = vlaneseq
    %v2341 = vshrl.u32 %v2340, 7
    %v2342 = vsub.s32 %v621, %v2341
    %v2343 = vrot.slane %v1907, %v2342
    %v2344 = vlaneseq
    %v2345 = vshrl.u32 %v2344, 7
    %v2346 = vsub.s32 %v621, %v2345
    %v2347 = vrot.slane %v1910, %v2346
    %v2348 = vlaneseq
    %v2349 = vshrl.u32 %v2348, 7
    %v2350 = vsub.s32 %v621, %v2349
    %v2351 = vrot.slane %v1913, %v2350
    %v2352 = vlaneseq
    %v2353 = vshrl.u32 %v2352, 7
    %v2354 = vsub.s32 %v621, %v2353
    %v2355 = vrot.slane %v1916, %v2354
    %v2356 = vlaneseq
    %v2357 = vshrl.u32 %v2356, 7
    %v2358 = vsub.s32 %v621, %v2357
    %v2359 = vrot.slane %v1919, %v2358
    %v2360 = vlaneseq
    %v2361 = vshrl.u32 %v2360, 7
    %v2362 = vsub.s32 %v621, %v2361
    %v2363 = vrot.slane %v1922, %v2362
    %v2364 = vlaneseq
    %v2365 = vshrl.u32 %v2364, 7
    %v2366 = vsub.s32 %v621, %v2365
    %v2367 = vrot.slane %v1925, %v2366
    %v2368 = vlaneseq
    %v2369 = vshrl.u32 %v2368, 7
    %v2370 = vsub.s32 %v621, %v2369
    %v2371 = vrot.slane %v1928, %v2370
    %v2372 = vlaneseq
    %v2373 = vshrl.u32 %v2372, 7
    %v2374 = vsub.s32 %v621, %v2373
    %v2375 = vrot.slane %v1931, %v2374
    %v2376 = vlaneseq
    %v2377 = vshrl.u32 %v2376, 7
    %v2378 = vsub.s32 %v621, %v2377
    %v2379 = vrot.slane %v1934, %v2378
    %v2380 = vlaneseq
    %v2381 = vshrl.u32 %v2380, 7
    %v2382 = vsub.s32 %v621, %v2381
    %v2383 = vrot.slane %v1937, %v2382
    %v2384 = vlaneseq
    %v2385 = vshrl.u32 %v2384, 7
    %v2386 = vsub.s32 %v621, %v2385
    %v2387 = vrot.slane %v1940, %v2386
    %v2388 = vlaneseq
    %v2389 = vshrl.u32 %v2388, 7
    %v2390 = vsub.s32 %v621, %v2389
    %v2391 = vrot.slane %v1943, %v2390
    %v2392 = vlaneseq
    %v2393 = vshrl.u32 %v2392, 7
    %v2394 = vsub.s32 %v621, %v2393
    %v2395 = vrot.slane %v1946, %v2394
    %v2396 = vlaneseq
    %v2397 = vshrl.u32 %v2396, 7
    %v2398 = vsub.s32 %v621, %v2397
    %v2399 = vrot.slane %v1949, %v2398
    %v2400 = vlaneseq
    %v2401 = vshrl.u32 %v2400, 7
    %v2402 = vsub.s32 %v621, %v2401
    %v2403 = vrot.slane %v1952, %v2402
    %v2404 = vlaneseq
    %v2405 = vshrl.u32 %v2404, 7
    %v2406 = vsub.s32 %v621, %v2405
    %v2407 = vrot.slane %v1955, %v2406
    %v2408 = vlaneseq
    %v2409 = vshrl.u32 %v2408, 7
    %v2410 = vsub.s32 %v621, %v2409
    %v2411 = vrot.slane %v1958, %v2410
    %v2412 = vlaneseq
    %v2413 = vshrl.u32 %v2412, 7
    %v2414 = vsub.s32 %v621, %v2413
    %v2415 = vrot.slane %v1961, %v2414
    %v2416 = vlaneseq
    %v2417 = vshrl.u32 %v2416, 7
    %v2418 = vsub.s32 %v621, %v2417
    %v2419 = vrot.slane %v1964, %v2418
    %v2420 = vlaneseq
    %v2421 = vshrl.u32 %v2420, 7
    %v2422 = vsub.s32 %v621, %v2421
    %v2423 = vrot.slane %v1967, %v2422
    %v2424 = vlaneseq
    %v2425 = vshrl.u32 %v2424, 7
    %v2426 = vsub.s32 %v621, %v2425
    %v2427 = vrot.slane %v1970, %v2426
    %v2428 = vlaneseq
    %v2429 = vshrl.u32 %v2428, 7
    %v2430 = vsub.s32 %v621, %v2429
    %v2431 = vrot.slane %v1973, %v2430
    %v2432 = vlaneseq
    %v2433 = vshrl.u32 %v2432, 7
    %v2434 = vsub.s32 %v621, %v2433
    %v2435 = vrot.slane %v1976, %v2434
    %v2436 = vlaneseq
    %v2437 = vshrl.u32 %v2436, 7
    %v2438 = vsub.s32 %v621, %v2437
    %v2439 = vrot.slane %v1979, %v2438
    %v2440 = vlaneseq
    %v2441 = vshrl.u32 %v2440, 7
    %v2442 = vsub.s32 %v621, %v2441
    %v2443 = vrot.slane %v1982, %v2442
    %v2444 = vlaneseq
    %v2445 = vshrl.u32 %v2444, 7
    %v2446 = vsub.s32 %v621, %v2445
    %v2447 = vrot.slane %v1985, %v2446
    %v2448 = vlaneseq
    %v2449 = vshrl.u32 %v2448, 7
    %v2450 = vsub.s32 %v621, %v2449
    %v2451 = vrot.slane %v1988, %v2450
    %v2452 = vlaneseq
    %v2453 = vshrl.u32 %v2452, 7
    %v2454 = vsub.s32 %v621, %v2453
    %v2455 = vrot.slane %v1991, %v2454
    %v2456 = vlaneseq
    %v2457 = vshrl.u32 %v2456, 7
    %v2458 = vsub.s32 %v621, %v2457
    %v2459 = vrot.slane %v1994, %v2458
    %v2460 = vlaneseq
    %v2461 = vshrl.u32 %v2460, 7
    %v2462 = vsub.s32 %v621, %v2461
    %v2463 = vrot.slane %v1997, %v2462
    %v2464 = vlaneseq
    %v2465 = vshrl.u32 %v2464, 7
    %v2466 = vsub.s32 %v621, %v2465
    %v2467 = vrot.slane %v2000, %v2466
    %v2468 = vlaneseq
    %v2469 = vshrl.u32 %v2468, 7
    %v2470 = vsub.s32 %v621, %v2469
    %v2471 = vrot.slane %v2003, %v2470
    %v2472 = vlaneseq
    %v2473 = vshrl.u32 %v2472, 7
    %v2474 = vsub.s32 %v621, %v2473
    %v2475 = vrot.slane %v2006, %v2474
    %v2476 = vlaneseq
    %v2477 = vshrl.u32 %v2476, 7
    %v2478 = vsub.s32 %v621, %v2477
    %v2479 = vrot.slane %v2009, %v2478
    %v2480 = vlaneseq
    %v2481 = vshrl.u32 %v2480, 7
    %v2482 = vsub.s32 %v621, %v2481
    %v2483 = vrot.slane %v2012, %v2482
    %v2484 = vlaneseq
    %v2485 = vshrl.u32 %v2484, 7
    %v2486 = vsub.s32 %v621, %v2485
    %v2487 = vrot.slane %v2015, %v2486
    %v2488 = vlaneseq
    %v2489 = vshrl.u32 %v2488, 7
    %v2490 = vsub.s32 %v621, %v2489
    %v2491 = vrot.slane %v2018, %v2490
    %v2492 = vlaneseq
    %v2493 = vshrl.u32 %v2492, 7
    %v2494 = vsub.s32 %v621, %v2493
    %v2495 = vrot.slane %v2021, %v2494
    %v2496 = vlaneseq
    %v2497 = vshrl.u32 %v2496, 7
    %v2498 = vsub.s32 %v621, %v2497
    %v2499 = vrot.slane %v2024, %v2498
    %v2500 = vlaneseq
    %v2501 = vshrl.u32 %v2500, 7
    %v2502 = vsub.s32 %v621, %v2501
    %v2503 = vrot.slane %v2027, %v2502
    %v2504 = vlaneseq
    %v2505 = vshrl.u32 %v2504, 7
    %v2506 = vsub.s32 %v621, %v2505
    %v2507 = vrot.slane %v2030, %v2506
    %v2508 = vlaneseq
    %v2509 = vshrl.u32 %v2508, 7
    %v2510 = vsub.s32 %v621, %v2509
    %v2511 = vrot.slane %v2033, %v2510
    %v2512 = vlaneseq
    %v2513 = vshrl.u32 %v2512, 7
    %v2514 = vsub.s32 %v621, %v2513
    %v2515 = vrot.slane %v2036, %v2514
    %v2516 = vlaneseq
    %v2517 = vshrl.u32 %v2516, 7
    %v2518 = vsub.s32 %v621, %v2517
    %v2519 = vrot.slane %v2039, %v2518
    %v2520 = vlaneseq
    %v2521 = vshrl.u32 %v2520, 7
    %v2522 = vsub.s32 %v621, %v2521
    %v2523 = vrot.slane %v2042, %v2522
    %v2524 = vlaneseq
    %v2525 = vshrl.u32 %v2524, 7
    %v2526 = vsub.s32 %v621, %v2525
    %v2527 = vrot.slane %v2045, %v2526
    %v2528 = vlaneseq
    %v2529 = vshrl.u32 %v2528, 7
    %v2530 = vsub.s32 %v621, %v2529
    %v2531 = vrot.slane %v2048, %v2530
    %v2532 = vlaneseq
    %v2533 = vshrl.u32 %v2532, 7
    %v2534 = vsub.s32 %v621, %v2533
    %v2535 = vrot.slane %v2051, %v2534
    %v2536 = vlaneseq
    %v2537 = vshrl.u32 %v2536, 7
    %v2538 = vsub.s32 %v621, %v2537
    %v2539 = vrot.slane %v2054, %v2538
    %v2540 = vlaneseq
    %v2541 = vshrl.u32 %v2540, 7
    %v2542 = vsub.s32 %v621, %v2541
    %v2543 = vrot.slane %v2057, %v2542
    %v2544 = vlaneseq
    %v2545 = vshrl.u32 %v2544, 7
    %v2546 = vsub.s32 %v621, %v2545
    %v2547 = vrot.slane %v2060, %v2546
    %v2548 = vlaneseq
    %v2549 = vshrl.u32 %v2548, 7
    %v2550 = vsub.s32 %v621, %v2549
    %v2551 = vrot.slane %v2063, %v2550
    %v2552 = vlaneseq
    %v2553 = vshrl.u32 %v2552, 7
    %v2554 = vsub.s32 %v621, %v2553
    %v2555 = vrot.slane %v2066, %v2554
    %v2556 = vlaneseq
    %v2557 = vshrl.u32 %v2556, 7
    %v2558 = vsub.s32 %v621, %v2557
    %v2559 = vrot.slane %v2069, %v2558
    %v2560 = vlaneseq
    %v2561 = vshrl.u32 %v2560, 7
    %v2562 = vsub.s32 %v621, %v2561
    %v2563 = vrot.slane %v2072, %v2562
    %v2564 = vlaneseq
    %v2565 = vshrl.u32 %v2564, 7
    %v2566 = vsub.s32 %v621, %v2565
    %v2567 = vrot.slane %v2075, %v2566
    %v2568 = vlaneseq
    %v2569 = vshrl.u32 %v2568, 7
    %v2570 = vsub.s32 %v621, %v2569
    %v2571 = vrot.slane %v2078, %v2570
    %v2572 = vlaneseq
    %v2573 = vshrl.u32 %v2572, 7
    %v2574 = vsub.s32 %v621, %v2573
    %v2575 = vrot.slane %v2081, %v2574
    %v2576 = vlaneseq
    %v2577 = vshrl.u32 %v2576, 7
    %v2578 = vsub.s32 %v621, %v2577
    %v2579 = vrot.slane %v2084, %v2578
    %v2580 = vlaneseq
    %v2581 = vshrl.u32 %v2580, 7
    %v2582 = vsub.s32 %v621, %v2581
    %v2583 = vrot.slane %v2087, %v2582
    %v2584 = vlaneseq
    %v2585 = vshrl.u32 %v2584, 7
    %v2586 = vsub.s32 %v621, %v2585
    %v2587 = vrot.slane %v2090, %v2586
    %v2588 = vlaneseq
    %v2589 = vshrl.u32 %v2588, 7
    %v2590 = vsub.s32 %v621, %v2589
    %v2591 = vrot.slane %v2093, %v2590
    %v2592 = vlaneseq
    %v2593 = vshrl.u32 %v2592, 7
    %v2594 = vsub.s32 %v621, %v2593
    %v2595 = vrot.slane %v2096, %v2594
    %v2596 = vlaneseq
    %v2597 = vshrl.u32 %v2596, 7
    %v2598 = vsub.s32 %v621, %v2597
    %v2599 = vrot.slane %v2099, %v2598
    %v2600 = vlaneseq
    %v2601 = vshrl.u32 %v2600, 7
    %v2602 = vsub.s32 %v621, %v2601
    %v2603 = vrot.slane %v2102, %v2602
    %v2604 = vlaneseq
    %v2605 = vshrl.u32 %v2604, 7
    %v2606 = vsub.s32 %v621, %v2605
    %v2607 = vrot.slane %v2105, %v2606
    %v2608 = vlaneseq
    %v2609 = vshrl.u32 %v2608, 7
    %v2610 = vsub.s32 %v621, %v2609
    %v2611 = vrot.slane %v2108, %v2610
    %v2612 = vlaneseq
    %v2613 = vshrl.u32 %v2612, 7
    %v2614 = vsub.s32 %v621, %v2613
    %v2615 = vrot.slane %v2111, %v2614
    %v2616 = vlaneseq
    %v2617 = vshrl.u32 %v2616, 7
    %v2618 = vsub.s32 %v621, %v2617
    %v2619 = vrot.slane %v2114, %v2618
    %v2620 = vlaneseq
    %v2621 = vshrl.u32 %v2620, 7
    %v2622 = vsub.s32 %v621, %v2621
    %v2623 = vrot.slane %v2117, %v2622
    %v2624 = vlaneseq
    %v2625 = vshrl.u32 %v2624, 7
    %v2626 = vsub.s32 %v621, %v2625
    %v2627 = vrot.slane %v2120, %v2626
    %v2628 = vlaneseq
    %v2629 = vshrl.u32 %v2628, 7
    %v2630 = vsub.s32 %v621, %v2629
    %v2631 = vrot.slane %v2123, %v2630
    %v2632 = vlaneseq
    %v2633 = vshrl.u32 %v2632, 7
    %v2634 = vsub.s32 %v621, %v2633
    %v2635 = vrot.slane %v2126, %v2634
    %v2636 = vlaneseq
    %v2637 = vshrl.u32 %v2636, 7
    %v2638 = vsub.s32 %v621, %v2637
    %v2639 = vrot.slane %v2129, %v2638
    %v2640 = vlaneseq
    %v2641 = vshrl.u32 %v2640, 7
    %v2642 = vsub.s32 %v621, %v2641
    %v2643 = vrot.slane %v2132, %v2642
    %v2644 = vlaneseq
    %v2645 = vshrl.u32 %v2644, 7
    %v2646 = vsub.s32 %v621, %v2645
    %v2647 = vrot.slane %v2135, %v2646
    %v2648 = vsel %vm948, %v2143, %v2139
    %v2649 = vsel %vm950, %v2147, %v2648
    %v2650 = vsel %vm952, %v2151, %v2649
    %vm2651 = vcmask 1044484
    %v2652 = vsel %vm2651, %v2155, %v2650
    %vm2653 = vcmask 1045509
    %v2654 = vsel %vm2653, %v2159, %v2652
    %vm2655 = vcmask 1046534
    %v2656 = vsel %vm2655, %v2163, %v2654
    %vm2657 = vcmask 1047559
    %v2658 = vsel %vm2657, %v2167, %v2656
    %v2659 = vsel %vm948, %v2175, %v2171
    %v2660 = vsel %vm950, %v2179, %v2659
    %v2661 = vsel %vm952, %v2183, %v2660
    %v2662 = vsel %vm2651, %v2187, %v2661
    %v2663 = vsel %vm2653, %v2191, %v2662
    %v2664 = vsel %vm2655, %v2195, %v2663
    %v2665 = vsel %vm2657, %v2199, %v2664
    %v2666 = vsel %vm948, %v2207, %v2203
    %v2667 = vsel %vm950, %v2211, %v2666
    %v2668 = vsel %vm952, %v2215, %v2667
    %v2669 = vsel %vm2651, %v2219, %v2668
    %v2670 = vsel %vm2653, %v2223, %v2669
    %v2671 = vsel %vm2655, %v2227, %v2670
    %v2672 = vsel %vm2657, %v2231, %v2671
    %v2673 = vsel %vm948, %v2239, %v2235
    %v2674 = vsel %vm950, %v2243, %v2673
    %v2675 = vsel %vm952, %v2247, %v2674
    %v2676 = vsel %vm2651, %v2251, %v2675
    %v2677 = vsel %vm2653, %v2255, %v2676
    %v2678 = vsel %vm2655, %v2259, %v2677
    %v2679 = vsel %vm2657, %v2263, %v2678
    %v2680 = vsel %vm948, %v2271, %v2267
    %v2681 = vsel %vm950, %v2275, %v2680
    %v2682 = vsel %vm952, %v2279, %v2681
    %v2683 = vsel %vm2651, %v2283, %v2682
    %v2684 = vsel %vm2653, %v2287, %v2683
    %v2685 = vsel %vm2655, %v2291, %v2684
    %v2686 = vsel %vm2657, %v2295, %v2685
    %v2687 = vsel %vm948, %v2303, %v2299
    %v2688 = vsel %vm950, %v2307, %v2687
    %v2689 = vsel %vm952, %v2311, %v2688
    %v2690 = vsel %vm2651, %v2315, %v2689
    %v2691 = vsel %vm2653, %v2319, %v2690
    %v2692 = vsel %vm2655, %v2323, %v2691
    %v2693 = vsel %vm2657, %v2327, %v2692
    %v2694 = vsel %vm948, %v2335, %v2331
    %v2695 = vsel %vm950, %v2339, %v2694
    %v2696 = vsel %vm952, %v2343, %v2695
    %v2697 = vsel %vm2651, %v2347, %v2696
    %v2698 = vsel %vm2653, %v2351, %v2697
    %v2699 = vsel %vm2655, %v2355, %v2698
    %v2700 = vsel %vm2657, %v2359, %v2699
    %v2701 = vsel %vm948, %v2367, %v2363
    %v2702 = vsel %vm950, %v2371, %v2701
    %v2703 = vsel %vm952, %v2375, %v2702
    %v2704 = vsel %vm2651, %v2379, %v2703
    %v2705 = vsel %vm2653, %v2383, %v2704
    %v2706 = vsel %vm2655, %v2387, %v2705
    %v2707 = vsel %vm2657, %v2391, %v2706
    %v2708 = vsel %vm948, %v2399, %v2395
    %v2709 = vsel %vm950, %v2403, %v2708
    %v2710 = vsel %vm952, %v2407, %v2709
    %v2711 = vsel %vm2651, %v2411, %v2710
    %v2712 = vsel %vm2653, %v2415, %v2711
    %v2713 = vsel %vm2655, %v2419, %v2712
    %v2714 = vsel %vm2657, %v2423, %v2713
    %v2715 = vsel %vm948, %v2431, %v2427
    %v2716 = vsel %vm950, %v2435, %v2715
    %v2717 = vsel %vm952, %v2439, %v2716
    %v2718 = vsel %vm2651, %v2443, %v2717
    %v2719 = vsel %vm2653, %v2447, %v2718
    %v2720 = vsel %vm2655, %v2451, %v2719
    %v2721 = vsel %vm2657, %v2455, %v2720
    %v2722 = vsel %vm948, %v2463, %v2459
    %v2723 = vsel %vm950, %v2467, %v2722
    %v2724 = vsel %vm952, %v2471, %v2723
    %v2725 = vsel %vm2651, %v2475, %v2724
    %v2726 = vsel %vm2653, %v2479, %v2725
    %v2727 = vsel %vm2655, %v2483, %v2726
    %v2728 = vsel %vm2657, %v2487, %v2727
    %v2729 = vsel %vm948, %v2495, %v2491
    %v2730 = vsel %vm950, %v2499, %v2729
    %v2731 = vsel %vm952, %v2503, %v2730
    %v2732 = vsel %vm2651, %v2507, %v2731
    %v2733 = vsel %vm2653, %v2511, %v2732
    %v2734 = vsel %vm2655, %v2515, %v2733
    %v2735 = vsel %vm2657, %v2519, %v2734
    %v2736 = vsel %vm948, %v2527, %v2523
    %v2737 = vsel %vm950, %v2531, %v2736
    %v2738 = vsel %vm952, %v2535, %v2737
    %v2739 = vsel %vm2651, %v2539, %v2738
    %v2740 = vsel %vm2653, %v2543, %v2739
    %v2741 = vsel %vm2655, %v2547, %v2740
    %v2742 = vsel %vm2657, %v2551, %v2741
    %v2743 = vsel %vm948, %v2559, %v2555
    %v2744 = vsel %vm950, %v2563, %v2743
    %v2745 = vsel %vm952, %v2567, %v2744
    %v2746 = vsel %vm2651, %v2571, %v2745
    %v2747 = vsel %vm2653, %v2575, %v2746
    %v2748 = vsel %vm2655, %v2579, %v2747
    %v2749 = vsel %vm2657, %v2583, %v2748
    %v2750 = vsel %vm948, %v2591, %v2587
    %v2751 = vsel %vm950, %v2595, %v2750
    %v2752 = vsel %vm952, %v2599, %v2751
    %v2753 = vsel %vm2651, %v2603, %v2752
    %v2754 = vsel %vm2653, %v2607, %v2753
    %v2755 = vsel %vm2655, %v2611, %v2754
    %v2756 = vsel %vm2657, %v2615, %v2755
    %v2757 = vsel %vm948, %v2623, %v2619
    %v2758 = vsel %vm950, %v2627, %v2757
    %v2759 = vsel %vm952, %v2631, %v2758
    %v2760 = vsel %vm2651, %v2635, %v2759
    %v2761 = vsel %vm2653, %v2639, %v2760
    %v2762 = vsel %vm2655, %v2643, %v2761
    %v2763 = vsel %vm2657, %v2647, %v2762
    %vm2780 = vcmask 31744
    %v2781 = vsel %vm2780, %v2658, 0.0
    %2782 = vadd.xlane.f32.xlu0 %v2781
    %v2783 = vpop.xlane.xlu0 %2782
    %v2784 = vsel %vm2780, %v2665, 0.0
    %2785 = vadd.xlane.f32.xlu0 %v2784
    %v2786 = vpop.xlane.xlu0 %2785
    %v2787 = vsel %vm2780, %v2672, 0.0
    %2788 = vadd.xlane.f32.xlu0 %v2787
    %v2789 = vpop.xlane.xlu0 %2788
    %v2790 = vsel %vm2780, %v2679, 0.0
    %2791 = vadd.xlane.f32.xlu0 %v2790
    %v2792 = vpop.xlane.xlu0 %2791
    %v2793 = vsel %vm2780, %v2686, 0.0
    %2794 = vadd.xlane.f32.xlu0 %v2793
    %v2795 = vpop.xlane.xlu0 %2794
    %v2796 = vsel %vm2780, %v2693, 0.0
    %2797 = vadd.xlane.f32.xlu0 %v2796
    %v2798 = vpop.xlane.xlu0 %2797
    %v2799 = vsel %vm2780, %v2700, 0.0
    %2800 = vadd.xlane.f32.xlu0 %v2799
    %v2801 = vpop.xlane.xlu0 %2800
    %v2802 = vsel %vm2780, %v2707, 0.0
    %2803 = vadd.xlane.f32.xlu0 %v2802
    %v2804 = vpop.xlane.xlu0 %2803
    %v2805 = vsel %vm2780, %v2714, 0.0
    %2806 = vadd.xlane.f32.xlu0 %v2805
    %v2807 = vpop.xlane.xlu0 %2806
    %v2808 = vsel %vm2780, %v2721, 0.0
    %2809 = vadd.xlane.f32.xlu0 %v2808
    %v2810 = vpop.xlane.xlu0 %2809
    %v2811 = vsel %vm2780, %v2728, 0.0
    %2812 = vadd.xlane.f32.xlu0 %v2811
    %v2813 = vpop.xlane.xlu0 %2812
    %v2814 = vsel %vm2780, %v2735, 0.0
    %2815 = vadd.xlane.f32.xlu0 %v2814
    %v2816 = vpop.xlane.xlu0 %2815
    %v2817 = vsel %vm2780, %v2742, 0.0
    %2818 = vadd.xlane.f32.xlu0 %v2817
    %v2819 = vpop.xlane.xlu0 %2818
    %v2820 = vsel %vm2780, %v2749, 0.0
    %2821 = vadd.xlane.f32.xlu0 %v2820
    %v2822 = vpop.xlane.xlu0 %2821
    %v2823 = vsel %vm2780, %v2756, 0.0
    %2824 = vadd.xlane.f32.xlu0 %v2823
    %v2825 = vpop.xlane.xlu0 %2824
    %v2826 = vsel %vm2780, %v2763, 0.0
    %2827 = vadd.xlane.f32.xlu0 %v2826
    %v2828 = vpop.xlane.xlu0 %2827
    %v2829 = vxor.u32 %v2783, 2147483648
    %v2830 = vxor.u32 %v2786, 2147483648
    %v2831 = vxor.u32 %v2789, 2147483648
    %v2832 = vxor.u32 %v2792, 2147483648
    %v2833 = vxor.u32 %v2795, 2147483648
    %v2834 = vxor.u32 %v2798, 2147483648
    %v2835 = vxor.u32 %v2801, 2147483648
    %v2836 = vxor.u32 %v2804, 2147483648
    %v2837 = vxor.u32 %v2807, 2147483648
    %v2838 = vxor.u32 %v2810, 2147483648
    %v2839 = vxor.u32 %v2813, 2147483648
    %v2840 = vxor.u32 %v2816, 2147483648
    %v2841 = vxor.u32 %v2819, 2147483648
    %v2842 = vxor.u32 %v2822, 2147483648
    %v2843 = vxor.u32 %v2825, 2147483648
    %v2844 = vxor.u32 %v2828, 2147483648
    %v2845 = vmul.f32 %v2829, 1.442695
    %v2846 = vpow.pop %v2845
    %v2847 = vmul.f32 %v2830, 1.442695
    %v2848 = vpow.pop %v2847
    %v2849 = vmul.f32 %v2831, 1.442695
    %v2850 = vpow.pop %v2849
    %v2851 = vmul.f32 %v2832, 1.442695
    %v2852 = vpow.pop %v2851
    %v2853 = vmul.f32 %v2833, 1.442695
    %v2854 = vpow.pop %v2853
    %v2855 = vmul.f32 %v2834, 1.442695
    %v2856 = vpow.pop %v2855
    %v2857 = vmul.f32 %v2835, 1.442695
    %v2858 = vpow.pop %v2857
    %v2859 = vmul.f32 %v2836, 1.442695
    %v2860 = vpow.pop %v2859
    %v2861 = vmul.f32 %v2837, 1.442695
    %v2862 = vpow.pop %v2861
    %v2863 = vmul.f32 %v2838, 1.442695
    %v2864 = vpow.pop %v2863
    %v2865 = vmul.f32 %v2839, 1.442695
    %v2866 = vpow.pop %v2865
    %v2867 = vmul.f32 %v2840, 1.442695
    %v2868 = vpow.pop %v2867
    %v2869 = vmul.f32 %v2841, 1.442695
    %v2870 = vpow.pop %v2869
    %v2871 = vmul.f32 %v2842, 1.442695
    %v2872 = vpow.pop %v2871
    %v2873 = vmul.f32 %v2843, 1.442695
    %v2874 = vpow.pop %v2873
    %v2875 = vmul.f32 %v2844, 1.442695
    %v2876 = vpow.pop %v2875
    %v2877 = vadd.f32 %v2846, 1.0
    %v2878 = vadd.f32 %v2848, 1.0
    %v2879 = vadd.f32 %v2850, 1.0
    %v2880 = vadd.f32 %v2852, 1.0
    %v2881 = vadd.f32 %v2854, 1.0
    %v2882 = vadd.f32 %v2856, 1.0
    %v2883 = vadd.f32 %v2858, 1.0
    %v2884 = vadd.f32 %v2860, 1.0
    %v2885 = vadd.f32 %v2862, 1.0
    %v2886 = vadd.f32 %v2864, 1.0
    %v2887 = vadd.f32 %v2866, 1.0
    %v2888 = vadd.f32 %v2868, 1.0
    %v2889 = vadd.f32 %v2870, 1.0
    %v2890 = vadd.f32 %v2872, 1.0
    %v2891 = vadd.f32 %v2874, 1.0
    %v2892 = vadd.f32 %v2876, 1.0
    %v2893 = vrcp.pop %v2877
    %v2894 = vmul.f32 1.0, %v2893
    %v2895 = vrcp.pop %v2878
    %v2896 = vmul.f32 1.0, %v2895
    %v2897 = vrcp.pop %v2879
    %v2898 = vmul.f32 1.0, %v2897
    %v2899 = vrcp.pop %v2880
    %v2900 = vmul.f32 1.0, %v2899
    %v2901 = vrcp.pop %v2881
    %v2902 = vmul.f32 1.0, %v2901
    %v2903 = vrcp.pop %v2882
    %v2904 = vmul.f32 1.0, %v2903
    %v2905 = vrcp.pop %v2883
    %v2906 = vmul.f32 1.0, %v2905
    %v2907 = vrcp.pop %v2884
    %v2908 = vmul.f32 1.0, %v2907
    %v2909 = vrcp.pop %v2885
    %v2910 = vmul.f32 1.0, %v2909
    %v2911 = vrcp.pop %v2886
    %v2912 = vmul.f32 1.0, %v2911
    %v2913 = vrcp.pop %v2887
    %v2914 = vmul.f32 1.0, %v2913
    %v2915 = vrcp.pop %v2888
    %v2916 = vmul.f32 1.0, %v2915
    %v2917 = vrcp.pop %v2889
    %v2918 = vmul.f32 1.0, %v2917
    %v2919 = vrcp.pop %v2890
    %v2920 = vmul.f32 1.0, %v2919
    %v2921 = vrcp.pop %v2891
    %v2922 = vmul.f32 1.0, %v2921
    %v2923 = vrcp.pop %v2892
    %v2924 = vmul.f32 1.0, %v2923
    %v2925 = vmul.f32 %v29, %v2894
    %v2926 = vmul.f32 %v30, %v2894
    %v2927 = vmul.f32 %v31, %v2896
    %v2928 = vmul.f32 %v32, %v2896
    %v2929 = vmul.f32 %v33, %v2898
    %v2930 = vmul.f32 %v34, %v2898
    %v2931 = vmul.f32 %v35, %v2900
    %v2932 = vmul.f32 %v36, %v2900
    %v2933 = vmul.f32 %v37, %v2902
    %v2934 = vmul.f32 %v38, %v2902
    %v2935 = vmul.f32 %v39, %v2904
    %v2936 = vmul.f32 %v40, %v2904
    %v2937 = vmul.f32 %v41, %v2906
    %v2938 = vmul.f32 %v42, %v2906
    %v2939 = vmul.f32 %v43, %v2908
    %v2940 = vmul.f32 %v44, %v2908
    %v2941 = vmul.f32 %v45, %v2910
    %v2942 = vmul.f32 %v46, %v2910
    %v2943 = vmul.f32 %v47, %v2912
    %v2944 = vmul.f32 %v48, %v2912
    %v2945 = vmul.f32 %v49, %v2914
    %v2946 = vmul.f32 %v50, %v2914
    %v2947 = vmul.f32 %v51, %v2916
    %v2948 = vmul.f32 %v52, %v2916
    %v2949 = vmul.f32 %v53, %v2918
    %v2950 = vmul.f32 %v54, %v2918
    %v2951 = vmul.f32 %v55, %v2920
    %v2952 = vmul.f32 %v56, %v2920
    %v2953 = vmul.f32 %v57, %v2922
    %v2954 = vmul.f32 %v58, %v2922
    %v2955 = vmul.f32 %v59, %v2924
    %v2956 = vmul.f32 %v60, %v2924
    %2957 = vst [vmem:[#allocation5] sm:$0xff] %v2925
    %2958 = vst [vmem:[#allocation5 + $0x8] sm:$0xff] %v2926
    %2959 = vst [vmem:[#allocation5 + $0x10] sm:$0xff] %v2927
    %2960 = vst [vmem:[#allocation5 + $0x18] sm:$0xff] %v2928
    %2961 = vst [vmem:[#allocation5 + $0x20] sm:$0xff] %v2929
    %2962 = vst [vmem:[#allocation5 + $0x28] sm:$0xff] %v2930
    %2963 = vst [vmem:[#allocation5 + $0x30] sm:$0xff] %v2931
    %2964 = vst [vmem:[#allocation5 + $0x38] sm:$0xff] %v2932
    %2965 = vst [vmem:[#allocation5 + $0x40] sm:$0xff] %v2933
    %2966 = vst [vmem:[#allocation5 + $0x48] sm:$0xff] %v2934
    %2967 = vst [vmem:[#allocation5 + $0x50] sm:$0xff] %v2935
    %2968 = vst [vmem:[#allocation5 + $0x58] sm:$0xff] %v2936
    %2969 = vst [vmem:[#allocation5 + $0x60] sm:$0xff] %v2937
    %2970 = vst [vmem:[#allocation5 + $0x68] sm:$0xff] %v2938
    %2971 = vst [vmem:[#allocation5 + $0x70] sm:$0xff] %v2939
    %2972 = vst [vmem:[#allocation5 + $0x78] sm:$0xff] %v2940
    %2973 = vst [vmem:[#allocation5 + $0x80] sm:$0xff] %v2941
    %2974 = vst [vmem:[#allocation5 + $0x88] sm:$0xff] %v2942
    %2975 = vst [vmem:[#allocation5 + $0x90] sm:$0xff] %v2943
    %2976 = vst [vmem:[#allocation5 + $0x98] sm:$0xff] %v2944
    %2977 = vst [vmem:[#allocation5 + $0xa0] sm:$0xff] %v2945
    %2978 = vst [vmem:[#allocation5 + $0xa8] sm:$0xff] %v2946
    %2979 = vst [vmem:[#allocation5 + $0xb0] sm:$0xff] %v2947
    %2980 = vst [vmem:[#allocation5 + $0xb8] sm:$0xff] %v2948
    %2981 = vst [vmem:[#allocation5 + $0xc0] sm:$0xff] %v2949
    %2982 = vst [vmem:[#allocation5 + $0xc8] sm:$0xff] %v2950
    %2983 = vst [vmem:[#allocation5 + $0xd0] sm:$0xff] %v2951
    %2984 = vst [vmem:[#allocation5 + $0xd8] sm:$0xff] %v2952
    %2985 = vst [vmem:[#allocation5 + $0xe0] sm:$0xff] %v2953
    %2986 = vst [vmem:[#allocation5 + $0xe8] sm:$0xff] %v2954
    %2987 = vst [vmem:[#allocation5 + $0xf0] sm:$0xff] %v2955
    %2988 = vst [vmem:[#allocation5 + $0xf8] sm:$0xff] %v2956
    // Predicated region
    $region18: #{tpu_custom_call.1} parent=1 // pred_check
      _
    $region19: #{tpu_custom_call.1} parent=1 // pred_check_branch
      %2990 = sbr.rel (0) target = $region21
    $region20: #{tpu_custom_call.1} parent=1 // pred_region
      %s2992 = ssub.s32 4096, 4096
      %2993 = vsyncadd [#allocation4], %s2992
      %s2994 = sshll.u32 [#allocation5], 4
      %s2995 = int_to_ptr.vmem [resolvable:$true] %s2994
      %3000 = dma.vmem_to_hbm [thread:$0]  %s2995, 4096, %s3, [#allocation4], 256, 256, 16
    $region21: #{tpu_custom_call.1} parent=1 // pred_fallthru
      _
    // Predicated region
    $region22: #{tpu_custom_call.1} parent=1 // pred_check
      _
    $region23: #{tpu_custom_call.1} parent=1 // pred_check_branch
      %3002 = sbr.rel (0) target = $region25
    $region24: #{tpu_custom_call.1} parent=1 // pred_region
      %3003 = dma.done [#allocation4], 4096
    $region25: #{tpu_custom_call.1} parent=1 // pred_fallthru
      _
    %3004 = vsyncpa [#allocation3], 1
    %3005 = vsyncpa [#allocation4], 1

</llo_original>
